<compile_context>
chip_gen: v7x
topology: tpu7x:2x2x1
jax: 0.10.0
libtpu: 0.0.40
codegen_flags: <defaults>
</compile_context>

<pallas_src>
import math

import numpy as np
import jax
import jax.numpy as jnp
from jax.experimental import pallas as pl
from jax.experimental.pallas import tpu as pltpu


def _build_tap_masks(H, W):
    """(9, H*W) float32 validity masks; tap order t = ky*3 + kx, offset (ky-1, kx-1)."""
    ys, xs = np.meshgrid(np.arange(H), np.arange(W), indexing="ij")
    ys = ys.reshape(-1)
    xs = xs.reshape(-1)
    masks = []
    for dy in (-1, 0, 1):
        for dx in (-1, 0, 1):
            valid = (ys + dy >= 0) & (ys + dy < H) & (xs + dx >= 0) & (xs + dx < W)
            masks.append(valid.astype(np.float32))
    return np.stack(masks, axis=0)


def _make_fused_kernel(H, W):
    HW = H * W
    # Lane-aligned halo pad for the flattened spatial dim (covers shifts up to +/-(W+1)).
    PAD = ((W + 1 + 127) // 128) * 128

    def _conv3x3_in_lrelu(x_cf, w_ref, b_ref, masks):
        """x_cf: (C_in, HW) channels-first f32. w_ref: (9, C_out, C_in). -> (C_out, HW)."""
        c_in = x_cf.shape[0]
        c_out = w_ref.shape[1]

        # Zero halo along the flattened spatial dim; all concat pieces are multiples of
        # 128 lanes, so this is a fully aligned, VMEM-only operation.
        zpad = jnp.zeros((c_in, PAD), jnp.float32)
        xpad = jnp.concatenate([zpad, x_cf, zpad], axis=1)       # (C_in, PAD+HW+PAD)

        acc = jnp.zeros((c_out, HW), jnp.float32)
        for t in range(9):
            dy, dx = t // 3 - 1, t % 3 - 1
            start = PAD + dy * W + dx
            # Shifted tap (static slice) with boundary wrap-around masked to zero.
            tap = xpad[:, start:start + HW] * masks[t:t + 1, :]  # (C_in, HW)
            acc = acc + jnp.dot(w_ref[t], tap,
                                preferred_element_type=jnp.float32)
        acc = acc + b_ref[...].astype(jnp.float32)

        # InstanceNorm2d(affine=False, eps=1e-5): biased stats over the spatial dim.
        inv_n = 1.0 / HW
        s = jnp.sum(acc, axis=1, keepdims=True)
        ss = jnp.sum(acc * acc, axis=1, keepdims=True)
        mean = s * inv_n
        var = jnp.maximum(ss * inv_n - mean * mean, 0.0)
        y = (acc - mean) * jax.lax.rsqrt(var + 1e-5)
        # LeakyReLU(negative_slope=0.01)
        return jnp.where(y >= 0, y, 0.01 * y)

    def kernel(x_ref, w1_ref, b1_ref, w2_ref, b2_ref, mask_ref, o_ref):
        masks = mask_ref[...]                                    # (9, HW)
        x = x_ref[0].astype(jnp.float32)                         # (Cin, HW)
        mid = _conv3x3_in_lrelu(x, w1_ref, b1_ref, masks)        # (Cmid, HW) stays in VMEM
        out = _conv3x3_in_lrelu(mid, w2_ref, b2_ref, masks)      # (Cout, HW)
        o_ref[0] = out.astype(o_ref.dtype)

    return kernel


def conv_block_nested_forward(x_nchw, params):
    """Matches conv_block_nested.forward. Input/output are NCHW like PyTorch."""
    N, Cin, H, W = x_nchw.shape
    w1, b1, w2, b2 = params["w1"], params["b1"], params["w2"], params["b2"]
    Cmid, Cout = w1.shape[0], w2.shape[0]
    HW = H * W

    # Tap-major weight layout: w_r[t, o, i] = w[o, i, ky, kx] with t = ky*3 + kx.
    w1_r = jnp.transpose(w1, (2, 3, 0, 1)).reshape(9, Cmid, Cin).astype(jnp.float32)
    w2_r = jnp.transpose(w2, (2, 3, 0, 1)).reshape(9, Cout, Cmid).astype(jnp.float32)
    b1_r = b1.reshape(Cmid, 1).astype(jnp.float32)
    b2_r = b2.reshape(Cout, 1).astype(jnp.float32)
    masks = jnp.asarray(_build_tap_masks(H, W))                  # (9, HW) {0,1} constants

    # NCHW -> (N, C, H*W): pure reshape, no transpose / HBM shuffle. The kernel keeps
    # channels-first throughout, so both its loads and stores are lane-dense.
    x_flat = x_nchw.reshape(N, Cin, HW)

    out_flat = pl.pallas_call(
        _make_fused_kernel(H, W),
        out_shape=jax.ShapeDtypeStruct((N, Cout, HW), x_nchw.dtype),
        grid_spec=pltpu.PrefetchScalarGridSpec(
            num_scalar_prefetch=0,
            grid=(N,),
            in_specs=[
                pl.BlockSpec((1, Cin, HW), lambda n: (n, 0, 0)),
                pl.BlockSpec((9, Cmid, Cin), lambda n: (0, 0, 0)),
                pl.BlockSpec((Cmid, 1), lambda n: (0, 0)),
                pl.BlockSpec((9, Cout, Cmid), lambda n: (0, 0, 0)),
                pl.BlockSpec((Cout, 1), lambda n: (0, 0)),
                pl.BlockSpec((9, HW), lambda n: (0, 0)),
            ],
            out_specs=pl.BlockSpec((1, Cout, HW), lambda n: (n, 0, 0)),
        ),
        compiler_params=pltpu.CompilerParams(
            dimension_semantics=("parallel",),
        ),
    )(x_flat, w1_r, b1_r, w2_r, b2_r, masks)

    # Free trailing-dim split; the kernel already produced NCHW-ordered data.
    return out_flat.reshape(N, Cout, H, W)


def init_params(key, in_ch, mid_ch, out_ch):
    """Deterministic Kaiming-uniform-style init; weights stored in PyTorch OIHW."""
    k1, k2, k3, k4 = jax.random.split(key, 4)

    def conv_init(kw, kb, cin, cout):
        fan_in = cin * 3 * 3
        bound = 1.0 / math.sqrt(fan_in)
        w = jax.random.uniform(kw, (cout, cin, 3, 3), jnp.float32, -bound, bound)
        b = jax.random.uniform(kb, (cout,), jnp.float32, -bound, bound)
        return w, b

    w1, b1 = conv_init(k1, k2, in_ch, mid_ch)
    w2, b2 = conv_init(k3, k4, mid_ch, out_ch)
    return {"w1": w1, "b1": b1, "w2": w2, "b2": b2}


def _reference_forward(x, params):
    """Pure-JAX/XLA reference of the PyTorch module (correctness self-check)."""
    def layer(x, w, b):
        y = jax.lax.conv_general_dilated(
            x, w, window_strides=(1, 1), padding=((1, 1), (1, 1)),
            dimension_numbers=("NCHW", "OIHW", "NCHW"),
            precision=jax.lax.Precision.HIGHEST)
        y = y + b[None, :, None, None]
        mean = jnp.mean(y, axis=(2, 3), keepdims=True)
        var = jnp.mean((y - mean) ** 2, axis=(2, 3), keepdims=True)
        y = (y - mean) * jax.lax.rsqrt(var + 1e-5)
        return jnp.where(y >= 0, y, 0.01 * y)

    x = layer(x, params["w1"], params["b1"])
    return layer(x, params["w2"], params["b2"])


if __name__ == "__main__":
    key = jax.random.PRNGKey(0)
    k_x, k_p = jax.random.split(key)

    N, in_ch, mid_ch, out_ch, H, W = 2, 4, 8, 4, 16, 16
    x = jax.random.normal(k_x, (N, in_ch, H, W), jnp.float32)
    params = init_params(k_p, in_ch, mid_ch, out_ch)

    out = conv_block_nested_forward(x, params)
    jax.block_until_ready(out)
    assert out.shape == (N, out_ch, H, W), out.shape

    ref = _reference_forward(x, params)
    max_err = float(jnp.max(jnp.abs(out - ref)))
    assert bool(jnp.allclose(out, ref, atol=5e-2, rtol=5e-2)), max_err

    print("KERNEL_OK")
</pallas_src>

<mosaic_0001>
module attributes {stable_mosaic.version = 11 : i64} {
  func.func @kernel(%arg0: i32, %arg1: memref<1x4x256xf32, #tpu.memory_space<vmem>>, %arg2: memref<9x8x4xf32, #tpu.memory_space<vmem>>, %arg3: memref<8x1xf32, #tpu.memory_space<vmem>>, %arg4: memref<9x4x8xf32, #tpu.memory_space<vmem>>, %arg5: memref<4x1xf32, #tpu.memory_space<vmem>>, %arg6: memref<9x256xf32, #tpu.memory_space<vmem>>, %arg7: memref<1x4x256xf32, #tpu.memory_space<vmem>>) attributes {dimension_semantics = [#tpu.dimension_semantics<parallel>], iteration_bounds = array<i64: 2>, scalar_prefetch = 0 : i64, scratch_operands = 0 : i64, tpu.core_type = #tpu.core_type<tc>, window_params = [{transform_indices = @transform_0, window_bounds = array<i64: 1, 4, 256>}, {pipeline_mode = #tpu.pipeline_mode<synchronous>, transform_indices = @transform_1, window_bounds = array<i64: 9, 8, 4>}, {pipeline_mode = #tpu.pipeline_mode<synchronous>, transform_indices = @transform_2, window_bounds = array<i64: 8, 1>}, {pipeline_mode = #tpu.pipeline_mode<synchronous>, transform_indices = @transform_3, window_bounds = array<i64: 9, 4, 8>}, {pipeline_mode = #tpu.pipeline_mode<synchronous>, transform_indices = @transform_4, window_bounds = array<i64: 4, 1>}, {pipeline_mode = #tpu.pipeline_mode<synchronous>, transform_indices = @transform_5, window_bounds = array<i64: 9, 256>}, {transform_indices = @transform_6, window_bounds = array<i64: 1, 4, 256>}]} {
    %c0 = arith.constant 0 : index
    %c0_0 = arith.constant 0 : index
    %0 = vector.load %arg6[%c0, %c0_0] : memref<9x256xf32, #tpu.memory_space<vmem>>, vector<9x256xf32>
    %c0_1 = arith.constant 0 : index
    %c0_2 = arith.constant 0 : index
    %c0_3 = arith.constant 0 : index
    %1 = vector.load %arg1[%c0_1, %c0_2, %c0_3] : memref<1x4x256xf32, #tpu.memory_space<vmem>>, vector<1x4x256xf32>
    %2 = vector.shape_cast %1 : vector<1x4x256xf32> to vector<4x256xf32>
    %cst = arith.constant 0.000000e+00 : f32
    %3 = vector.broadcast %cst : f32 to vector<4x128xf32>
    %4 = tpu.concatenate %3, %2, %3 in 1 : vector<4x128xf32>, vector<4x256xf32>, vector<4x128xf32> -> vector<4x512xf32>
    %cst_4 = arith.constant 0.000000e+00 : f32
    %5 = vector.broadcast %cst_4 : f32 to vector<8x256xf32>
    %6 = vector.extract_strided_slice %4 {offsets = [0, 111], sizes = [4, 256], strides = [1, 1]} : vector<4x512xf32> to vector<4x256xf32>
    %7 = vector.extract_strided_slice %0 {offsets = [0, 0], sizes = [1, 256], strides = [1, 1]} : vector<9x256xf32> to vector<1x256xf32>
    %8 = vector.broadcast %7 : vector<1x256xf32> to vector<4x256xf32>
    %9 = arith.mulf %6, %8 : vector<4x256xf32>
    %c0_5 = arith.constant 0 : index
    %c0_6 = arith.constant 0 : index
    %c0_7 = arith.constant 0 : index
    %10 = vector.load %arg2[%c0_5, %c0_6, %c0_7] : memref<9x8x4xf32, #tpu.memory_space<vmem>>, vector<1x8x4xf32>
    %11 = vector.shape_cast %10 : vector<1x8x4xf32> to vector<8x4xf32>
    %cst_8 = arith.constant dense<0.000000e+00> : vector<8x256xf32>
    %12 = tpu.matmul %11, %9, %cst_8 {dimension_numbers = #tpu.dot_dimension_numbers<[1], [0], [0], [1], [0, 0, 1, 1], [], []>} : vector<8x4xf32>, vector<4x256xf32>, vector<8x256xf32> -> vector<8x256xf32>
    %13 = arith.addf %5, %12 : vector<8x256xf32>
    %14 = vector.extract_strided_slice %4 {offsets = [0, 112], sizes = [4, 256], strides = [1, 1]} : vector<4x512xf32> to vector<4x256xf32>
    %15 = vector.extract_strided_slice %0 {offsets = [1, 0], sizes = [1, 256], strides = [1, 1]} : vector<9x256xf32> to vector<1x256xf32>
    %16 = vector.broadcast %15 : vector<1x256xf32> to vector<4x256xf32>
    %17 = arith.mulf %14, %16 : vector<4x256xf32>
    %c1 = arith.constant 1 : index
    %c0_9 = arith.constant 0 : index
    %c0_10 = arith.constant 0 : index
    %18 = vector.load %arg2[%c1, %c0_9, %c0_10] : memref<9x8x4xf32, #tpu.memory_space<vmem>>, vector<1x8x4xf32>
    %19 = vector.shape_cast %18 : vector<1x8x4xf32> to vector<8x4xf32>
    %cst_11 = arith.constant dense<0.000000e+00> : vector<8x256xf32>
    %20 = tpu.matmul %19, %17, %cst_11 {dimension_numbers = #tpu.dot_dimension_numbers<[1], [0], [0], [1], [0, 0, 1, 1], [], []>} : vector<8x4xf32>, vector<4x256xf32>, vector<8x256xf32> -> vector<8x256xf32>
    %21 = arith.addf %13, %20 : vector<8x256xf32>
    %22 = vector.extract_strided_slice %4 {offsets = [0, 113], sizes = [4, 256], strides = [1, 1]} : vector<4x512xf32> to vector<4x256xf32>
    %23 = vector.extract_strided_slice %0 {offsets = [2, 0], sizes = [1, 256], strides = [1, 1]} : vector<9x256xf32> to vector<1x256xf32>
    %24 = vector.broadcast %23 : vector<1x256xf32> to vector<4x256xf32>
    %25 = arith.mulf %22, %24 : vector<4x256xf32>
    %c2 = arith.constant 2 : index
    %c0_12 = arith.constant 0 : index
    %c0_13 = arith.constant 0 : index
    %26 = vector.load %arg2[%c2, %c0_12, %c0_13] : memref<9x8x4xf32, #tpu.memory_space<vmem>>, vector<1x8x4xf32>
    %27 = vector.shape_cast %26 : vector<1x8x4xf32> to vector<8x4xf32>
    %cst_14 = arith.constant dense<0.000000e+00> : vector<8x256xf32>
    %28 = tpu.matmul %27, %25, %cst_14 {dimension_numbers = #tpu.dot_dimension_numbers<[1], [0], [0], [1], [0, 0, 1, 1], [], []>} : vector<8x4xf32>, vector<4x256xf32>, vector<8x256xf32> -> vector<8x256xf32>
    %29 = arith.addf %21, %28 : vector<8x256xf32>
    %30 = vector.extract_strided_slice %4 {offsets = [0, 127], sizes = [4, 256], strides = [1, 1]} : vector<4x512xf32> to vector<4x256xf32>
    %31 = vector.extract_strided_slice %0 {offsets = [3, 0], sizes = [1, 256], strides = [1, 1]} : vector<9x256xf32> to vector<1x256xf32>
    %32 = vector.broadcast %31 : vector<1x256xf32> to vector<4x256xf32>
    %33 = arith.mulf %30, %32 : vector<4x256xf32>
    %c3 = arith.constant 3 : index
    %c0_15 = arith.constant 0 : index
    %c0_16 = arith.constant 0 : index
    %34 = vector.load %arg2[%c3, %c0_15, %c0_16] : memref<9x8x4xf32, #tpu.memory_space<vmem>>, vector<1x8x4xf32>
    %35 = vector.shape_cast %34 : vector<1x8x4xf32> to vector<8x4xf32>
    %cst_17 = arith.constant dense<0.000000e+00> : vector<8x256xf32>
    %36 = tpu.matmul %35, %33, %cst_17 {dimension_numbers = #tpu.dot_dimension_numbers<[1], [0], [0], [1], [0, 0, 1, 1], [], []>} : vector<8x4xf32>, vector<4x256xf32>, vector<8x256xf32> -> vector<8x256xf32>
    %37 = arith.addf %29, %36 : vector<8x256xf32>
    %38 = vector.extract_strided_slice %4 {offsets = [0, 128], sizes = [4, 256], strides = [1, 1]} : vector<4x512xf32> to vector<4x256xf32>
    %39 = vector.extract_strided_slice %0 {offsets = [4, 0], sizes = [1, 256], strides = [1, 1]} : vector<9x256xf32> to vector<1x256xf32>
    %40 = vector.broadcast %39 : vector<1x256xf32> to vector<4x256xf32>
    %41 = arith.mulf %38, %40 : vector<4x256xf32>
    %c4 = arith.constant 4 : index
    %c0_18 = arith.constant 0 : index
    %c0_19 = arith.constant 0 : index
    %42 = vector.load %arg2[%c4, %c0_18, %c0_19] : memref<9x8x4xf32, #tpu.memory_space<vmem>>, vector<1x8x4xf32>
    %43 = vector.shape_cast %42 : vector<1x8x4xf32> to vector<8x4xf32>
    %cst_20 = arith.constant dense<0.000000e+00> : vector<8x256xf32>
    %44 = tpu.matmul %43, %41, %cst_20 {dimension_numbers = #tpu.dot_dimension_numbers<[1], [0], [0], [1], [0, 0, 1, 1], [], []>} : vector<8x4xf32>, vector<4x256xf32>, vector<8x256xf32> -> vector<8x256xf32>
    %45 = arith.addf %37, %44 : vector<8x256xf32>
    %46 = vector.extract_strided_slice %4 {offsets = [0, 129], sizes = [4, 256], strides = [1, 1]} : vector<4x512xf32> to vector<4x256xf32>
    %47 = vector.extract_strided_slice %0 {offsets = [5, 0], sizes = [1, 256], strides = [1, 1]} : vector<9x256xf32> to vector<1x256xf32>
    %48 = vector.broadcast %47 : vector<1x256xf32> to vector<4x256xf32>
    %49 = arith.mulf %46, %48 : vector<4x256xf32>
    %c5 = arith.constant 5 : index
    %c0_21 = arith.constant 0 : index
    %c0_22 = arith.constant 0 : index
    %50 = vector.load %arg2[%c5, %c0_21, %c0_22] : memref<9x8x4xf32, #tpu.memory_space<vmem>>, vector<1x8x4xf32>
    %51 = vector.shape_cast %50 : vector<1x8x4xf32> to vector<8x4xf32>
    %cst_23 = arith.constant dense<0.000000e+00> : vector<8x256xf32>
    %52 = tpu.matmul %51, %49, %cst_23 {dimension_numbers = #tpu.dot_dimension_numbers<[1], [0], [0], [1], [0, 0, 1, 1], [], []>} : vector<8x4xf32>, vector<4x256xf32>, vector<8x256xf32> -> vector<8x256xf32>
    %53 = arith.addf %45, %52 : vector<8x256xf32>
    %54 = vector.extract_strided_slice %4 {offsets = [0, 143], sizes = [4, 256], strides = [1, 1]} : vector<4x512xf32> to vector<4x256xf32>
    %55 = vector.extract_strided_slice %0 {offsets = [6, 0], sizes = [1, 256], strides = [1, 1]} : vector<9x256xf32> to vector<1x256xf32>
    %56 = vector.broadcast %55 : vector<1x256xf32> to vector<4x256xf32>
    %57 = arith.mulf %54, %56 : vector<4x256xf32>
    %c6 = arith.constant 6 : index
    %c0_24 = arith.constant 0 : index
    %c0_25 = arith.constant 0 : index
    %58 = vector.load %arg2[%c6, %c0_24, %c0_25] : memref<9x8x4xf32, #tpu.memory_space<vmem>>, vector<1x8x4xf32>
    %59 = vector.shape_cast %58 : vector<1x8x4xf32> to vector<8x4xf32>
    %cst_26 = arith.constant dense<0.000000e+00> : vector<8x256xf32>
    %60 = tpu.matmul %59, %57, %cst_26 {dimension_numbers = #tpu.dot_dimension_numbers<[1], [0], [0], [1], [0, 0, 1, 1], [], []>} : vector<8x4xf32>, vector<4x256xf32>, vector<8x256xf32> -> vector<8x256xf32>
    %61 = arith.addf %53, %60 : vector<8x256xf32>
    %62 = vector.extract_strided_slice %4 {offsets = [0, 144], sizes = [4, 256], strides = [1, 1]} : vector<4x512xf32> to vector<4x256xf32>
    %63 = vector.extract_strided_slice %0 {offsets = [7, 0], sizes = [1, 256], strides = [1, 1]} : vector<9x256xf32> to vector<1x256xf32>
    %64 = vector.broadcast %63 : vector<1x256xf32> to vector<4x256xf32>
    %65 = arith.mulf %62, %64 : vector<4x256xf32>
    %c7 = arith.constant 7 : index
    %c0_27 = arith.constant 0 : index
    %c0_28 = arith.constant 0 : index
    %66 = vector.load %arg2[%c7, %c0_27, %c0_28] : memref<9x8x4xf32, #tpu.memory_space<vmem>>, vector<1x8x4xf32>
    %67 = vector.shape_cast %66 : vector<1x8x4xf32> to vector<8x4xf32>
    %cst_29 = arith.constant dense<0.000000e+00> : vector<8x256xf32>
    %68 = tpu.matmul %67, %65, %cst_29 {dimension_numbers = #tpu.dot_dimension_numbers<[1], [0], [0], [1], [0, 0, 1, 1], [], []>} : vector<8x4xf32>, vector<4x256xf32>, vector<8x256xf32> -> vector<8x256xf32>
    %69 = arith.addf %61, %68 : vector<8x256xf32>
    %70 = vector.extract_strided_slice %4 {offsets = [0, 145], sizes = [4, 256], strides = [1, 1]} : vector<4x512xf32> to vector<4x256xf32>
    %71 = vector.extract_strided_slice %0 {offsets = [8, 0], sizes = [1, 256], strides = [1, 1]} : vector<9x256xf32> to vector<1x256xf32>
    %72 = vector.broadcast %71 : vector<1x256xf32> to vector<4x256xf32>
    %73 = arith.mulf %70, %72 : vector<4x256xf32>
    %c8 = arith.constant 8 : index
    %c0_30 = arith.constant 0 : index
    %c0_31 = arith.constant 0 : index
    %74 = vector.load %arg2[%c8, %c0_30, %c0_31] : memref<9x8x4xf32, #tpu.memory_space<vmem>>, vector<1x8x4xf32>
    %75 = vector.shape_cast %74 : vector<1x8x4xf32> to vector<8x4xf32>
    %cst_32 = arith.constant dense<0.000000e+00> : vector<8x256xf32>
    %76 = tpu.matmul %75, %73, %cst_32 {dimension_numbers = #tpu.dot_dimension_numbers<[1], [0], [0], [1], [0, 0, 1, 1], [], []>} : vector<8x4xf32>, vector<4x256xf32>, vector<8x256xf32> -> vector<8x256xf32>
    %77 = arith.addf %69, %76 : vector<8x256xf32>
    %c0_33 = arith.constant 0 : index
    %c0_34 = arith.constant 0 : index
    %78 = vector.load %arg3[%c0_33, %c0_34] : memref<8x1xf32, #tpu.memory_space<vmem>>, vector<8x1xf32>
    %79 = vector.broadcast %78 : vector<8x1xf32> to vector<8x256xf32>
    %80 = arith.addf %77, %79 : vector<8x256xf32>
    %cst_35 = arith.constant dense<0.000000e+00> : vector<8xf32>
    %81 = vector.multi_reduction <add>, %80, %cst_35 [1] : vector<8x256xf32> to vector<8xf32>
    %82 = vector.shape_cast %81 : vector<8xf32> to vector<8x1xf32>
    %83 = arith.mulf %80, %80 : vector<8x256xf32>
    %cst_36 = arith.constant dense<0.000000e+00> : vector<8xf32>
    %84 = vector.multi_reduction <add>, %83, %cst_36 [1] : vector<8x256xf32> to vector<8xf32>
    %85 = vector.shape_cast %84 : vector<8xf32> to vector<8x1xf32>
    %cst_37 = arith.constant 3.906250e-03 : f32
    %86 = vector.broadcast %cst_37 : f32 to vector<8x1xf32>
    %87 = arith.mulf %82, %86 : vector<8x1xf32>
    %cst_38 = arith.constant 3.906250e-03 : f32
    %88 = vector.broadcast %cst_38 : f32 to vector<8x1xf32>
    %89 = arith.mulf %85, %88 : vector<8x1xf32>
    %90 = arith.mulf %87, %87 : vector<8x1xf32>
    %91 = arith.subf %89, %90 : vector<8x1xf32>
    %cst_39 = arith.constant 0.000000e+00 : f32
    %92 = vector.broadcast %cst_39 : f32 to vector<8x1xf32>
    %93 = arith.maximumf %91, %92 : vector<8x1xf32>
    %94 = vector.broadcast %87 : vector<8x1xf32> to vector<8x256xf32>
    %95 = arith.subf %80, %94 : vector<8x256xf32>
    %cst_40 = arith.constant 9.99999974E-6 : f32
    %96 = vector.broadcast %cst_40 : f32 to vector<8x1xf32>
    %97 = arith.addf %93, %96 : vector<8x1xf32>
    %98 = math.rsqrt %97 : vector<8x1xf32>
    %99 = vector.broadcast %98 : vector<8x1xf32> to vector<8x256xf32>
    %100 = arith.mulf %95, %99 : vector<8x256xf32>
    %cst_41 = arith.constant 0.000000e+00 : f32
    %101 = vector.broadcast %cst_41 : f32 to vector<8x256xf32>
    %102 = arith.cmpf oge, %100, %101 : vector<8x256xf32>
    %cst_42 = arith.constant 0.00999999977 : f32
    %103 = vector.broadcast %cst_42 : f32 to vector<8x256xf32>
    %104 = arith.mulf %103, %100 : vector<8x256xf32>
    %105 = arith.select %102, %100, %104 : vector<8x256xi1>, vector<8x256xf32>
    %cst_43 = arith.constant 0.000000e+00 : f32
    %106 = vector.broadcast %cst_43 : f32 to vector<8x128xf32>
    %107 = tpu.concatenate %106, %105, %106 in 1 : vector<8x128xf32>, vector<8x256xf32>, vector<8x128xf32> -> vector<8x512xf32>
    %cst_44 = arith.constant 0.000000e+00 : f32
    %108 = vector.broadcast %cst_44 : f32 to vector<4x256xf32>
    %109 = vector.extract_strided_slice %107 {offsets = [0, 111], sizes = [8, 256], strides = [1, 1]} : vector<8x512xf32> to vector<8x256xf32>
    %110 = vector.extract_strided_slice %0 {offsets = [0, 0], sizes = [1, 256], strides = [1, 1]} : vector<9x256xf32> to vector<1x256xf32>
    %111 = vector.broadcast %110 : vector<1x256xf32> to vector<8x256xf32>
    %112 = arith.mulf %109, %111 : vector<8x256xf32>
    %c0_45 = arith.constant 0 : index
    %c0_46 = arith.constant 0 : index
    %c0_47 = arith.constant 0 : index
    %113 = vector.load %arg4[%c0_45, %c0_46, %c0_47] : memref<9x4x8xf32, #tpu.memory_space<vmem>>, vector<1x4x8xf32>
    %114 = vector.shape_cast %113 : vector<1x4x8xf32> to vector<4x8xf32>
    %cst_48 = arith.constant dense<0.000000e+00> : vector<4x256xf32>
    %115 = tpu.matmul %114, %112, %cst_48 {dimension_numbers = #tpu.dot_dimension_numbers<[1], [0], [0], [1], [0, 0, 1, 1], [], []>} : vector<4x8xf32>, vector<8x256xf32>, vector<4x256xf32> -> vector<4x256xf32>
    %116 = arith.addf %108, %115 : vector<4x256xf32>
    %117 = vector.extract_strided_slice %107 {offsets = [0, 112], sizes = [8, 256], strides = [1, 1]} : vector<8x512xf32> to vector<8x256xf32>
    %118 = vector.extract_strided_slice %0 {offsets = [1, 0], sizes = [1, 256], strides = [1, 1]} : vector<9x256xf32> to vector<1x256xf32>
    %119 = vector.broadcast %118 : vector<1x256xf32> to vector<8x256xf32>
    %120 = arith.mulf %117, %119 : vector<8x256xf32>
    %c1_49 = arith.constant 1 : index
    %c0_50 = arith.constant 0 : index
    %c0_51 = arith.constant 0 : index
    %121 = vector.load %arg4[%c1_49, %c0_50, %c0_51] : memref<9x4x8xf32, #tpu.memory_space<vmem>>, vector<1x4x8xf32>
    %122 = vector.shape_cast %121 : vector<1x4x8xf32> to vector<4x8xf32>
    %cst_52 = arith.constant dense<0.000000e+00> : vector<4x256xf32>
    %123 = tpu.matmul %122, %120, %cst_52 {dimension_numbers = #tpu.dot_dimension_numbers<[1], [0], [0], [1], [0, 0, 1, 1], [], []>} : vector<4x8xf32>, vector<8x256xf32>, vector<4x256xf32> -> vector<4x256xf32>
    %124 = arith.addf %116, %123 : vector<4x256xf32>
    %125 = vector.extract_strided_slice %107 {offsets = [0, 113], sizes = [8, 256], strides = [1, 1]} : vector<8x512xf32> to vector<8x256xf32>
    %126 = vector.extract_strided_slice %0 {offsets = [2, 0], sizes = [1, 256], strides = [1, 1]} : vector<9x256xf32> to vector<1x256xf32>
    %127 = vector.broadcast %126 : vector<1x256xf32> to vector<8x256xf32>
    %128 = arith.mulf %125, %127 : vector<8x256xf32>
    %c2_53 = arith.constant 2 : index
    %c0_54 = arith.constant 0 : index
    %c0_55 = arith.constant 0 : index
    %129 = vector.load %arg4[%c2_53, %c0_54, %c0_55] : memref<9x4x8xf32, #tpu.memory_space<vmem>>, vector<1x4x8xf32>
    %130 = vector.shape_cast %129 : vector<1x4x8xf32> to vector<4x8xf32>
    %cst_56 = arith.constant dense<0.000000e+00> : vector<4x256xf32>
    %131 = tpu.matmul %130, %128, %cst_56 {dimension_numbers = #tpu.dot_dimension_numbers<[1], [0], [0], [1], [0, 0, 1, 1], [], []>} : vector<4x8xf32>, vector<8x256xf32>, vector<4x256xf32> -> vector<4x256xf32>
    %132 = arith.addf %124, %131 : vector<4x256xf32>
    %133 = vector.extract_strided_slice %107 {offsets = [0, 127], sizes = [8, 256], strides = [1, 1]} : vector<8x512xf32> to vector<8x256xf32>
    %134 = vector.extract_strided_slice %0 {offsets = [3, 0], sizes = [1, 256], strides = [1, 1]} : vector<9x256xf32> to vector<1x256xf32>
    %135 = vector.broadcast %134 : vector<1x256xf32> to vector<8x256xf32>
    %136 = arith.mulf %133, %135 : vector<8x256xf32>
    %c3_57 = arith.constant 3 : index
    %c0_58 = arith.constant 0 : index
    %c0_59 = arith.constant 0 : index
    %137 = vector.load %arg4[%c3_57, %c0_58, %c0_59] : memref<9x4x8xf32, #tpu.memory_space<vmem>>, vector<1x4x8xf32>
    %138 = vector.shape_cast %137 : vector<1x4x8xf32> to vector<4x8xf32>
    %cst_60 = arith.constant dense<0.000000e+00> : vector<4x256xf32>
    %139 = tpu.matmul %138, %136, %cst_60 {dimension_numbers = #tpu.dot_dimension_numbers<[1], [0], [0], [1], [0, 0, 1, 1], [], []>} : vector<4x8xf32>, vector<8x256xf32>, vector<4x256xf32> -> vector<4x256xf32>
    %140 = arith.addf %132, %139 : vector<4x256xf32>
    %141 = vector.extract_strided_slice %107 {offsets = [0, 128], sizes = [8, 256], strides = [1, 1]} : vector<8x512xf32> to vector<8x256xf32>
    %142 = vector.extract_strided_slice %0 {offsets = [4, 0], sizes = [1, 256], strides = [1, 1]} : vector<9x256xf32> to vector<1x256xf32>
    %143 = vector.broadcast %142 : vector<1x256xf32> to vector<8x256xf32>
    %144 = arith.mulf %141, %143 : vector<8x256xf32>
    %c4_61 = arith.constant 4 : index
    %c0_62 = arith.constant 0 : index
    %c0_63 = arith.constant 0 : index
    %145 = vector.load %arg4[%c4_61, %c0_62, %c0_63] : memref<9x4x8xf32, #tpu.memory_space<vmem>>, vector<1x4x8xf32>
    %146 = vector.shape_cast %145 : vector<1x4x8xf32> to vector<4x8xf32>
    %cst_64 = arith.constant dense<0.000000e+00> : vector<4x256xf32>
    %147 = tpu.matmul %146, %144, %cst_64 {dimension_numbers = #tpu.dot_dimension_numbers<[1], [0], [0], [1], [0, 0, 1, 1], [], []>} : vector<4x8xf32>, vector<8x256xf32>, vector<4x256xf32> -> vector<4x256xf32>
    %148 = arith.addf %140, %147 : vector<4x256xf32>
    %149 = vector.extract_strided_slice %107 {offsets = [0, 129], sizes = [8, 256], strides = [1, 1]} : vector<8x512xf32> to vector<8x256xf32>
    %150 = vector.extract_strided_slice %0 {offsets = [5, 0], sizes = [1, 256], strides = [1, 1]} : vector<9x256xf32> to vector<1x256xf32>
    %151 = vector.broadcast %150 : vector<1x256xf32> to vector<8x256xf32>
    %152 = arith.mulf %149, %151 : vector<8x256xf32>
    %c5_65 = arith.constant 5 : index
    %c0_66 = arith.constant 0 : index
    %c0_67 = arith.constant 0 : index
    %153 = vector.load %arg4[%c5_65, %c0_66, %c0_67] : memref<9x4x8xf32, #tpu.memory_space<vmem>>, vector<1x4x8xf32>
    %154 = vector.shape_cast %153 : vector<1x4x8xf32> to vector<4x8xf32>
    %cst_68 = arith.constant dense<0.000000e+00> : vector<4x256xf32>
    %155 = tpu.matmul %154, %152, %cst_68 {dimension_numbers = #tpu.dot_dimension_numbers<[1], [0], [0], [1], [0, 0, 1, 1], [], []>} : vector<4x8xf32>, vector<8x256xf32>, vector<4x256xf32> -> vector<4x256xf32>
    %156 = arith.addf %148, %155 : vector<4x256xf32>
    %157 = vector.extract_strided_slice %107 {offsets = [0, 143], sizes = [8, 256], strides = [1, 1]} : vector<8x512xf32> to vector<8x256xf32>
    %158 = vector.extract_strided_slice %0 {offsets = [6, 0], sizes = [1, 256], strides = [1, 1]} : vector<9x256xf32> to vector<1x256xf32>
    %159 = vector.broadcast %158 : vector<1x256xf32> to vector<8x256xf32>
    %160 = arith.mulf %157, %159 : vector<8x256xf32>
    %c6_69 = arith.constant 6 : index
    %c0_70 = arith.constant 0 : index
    %c0_71 = arith.constant 0 : index
    %161 = vector.load %arg4[%c6_69, %c0_70, %c0_71] : memref<9x4x8xf32, #tpu.memory_space<vmem>>, vector<1x4x8xf32>
    %162 = vector.shape_cast %161 : vector<1x4x8xf32> to vector<4x8xf32>
    %cst_72 = arith.constant dense<0.000000e+00> : vector<4x256xf32>
    %163 = tpu.matmul %162, %160, %cst_72 {dimension_numbers = #tpu.dot_dimension_numbers<[1], [0], [0], [1], [0, 0, 1, 1], [], []>} : vector<4x8xf32>, vector<8x256xf32>, vector<4x256xf32> -> vector<4x256xf32>
    %164 = arith.addf %156, %163 : vector<4x256xf32>
    %165 = vector.extract_strided_slice %107 {offsets = [0, 144], sizes = [8, 256], strides = [1, 1]} : vector<8x512xf32> to vector<8x256xf32>
    %166 = vector.extract_strided_slice %0 {offsets = [7, 0], sizes = [1, 256], strides = [1, 1]} : vector<9x256xf32> to vector<1x256xf32>
    %167 = vector.broadcast %166 : vector<1x256xf32> to vector<8x256xf32>
    %168 = arith.mulf %165, %167 : vector<8x256xf32>
    %c7_73 = arith.constant 7 : index
    %c0_74 = arith.constant 0 : index
    %c0_75 = arith.constant 0 : index
    %169 = vector.load %arg4[%c7_73, %c0_74, %c0_75] : memref<9x4x8xf32, #tpu.memory_space<vmem>>, vector<1x4x8xf32>
    %170 = vector.shape_cast %169 : vector<1x4x8xf32> to vector<4x8xf32>
    %cst_76 = arith.constant dense<0.000000e+00> : vector<4x256xf32>
    %171 = tpu.matmul %170, %168, %cst_76 {dimension_numbers = #tpu.dot_dimension_numbers<[1], [0], [0], [1], [0, 0, 1, 1], [], []>} : vector<4x8xf32>, vector<8x256xf32>, vector<4x256xf32> -> vector<4x256xf32>
    %172 = arith.addf %164, %171 : vector<4x256xf32>
    %173 = vector.extract_strided_slice %107 {offsets = [0, 145], sizes = [8, 256], strides = [1, 1]} : vector<8x512xf32> to vector<8x256xf32>
    %174 = vector.extract_strided_slice %0 {offsets = [8, 0], sizes = [1, 256], strides = [1, 1]} : vector<9x256xf32> to vector<1x256xf32>
    %175 = vector.broadcast %174 : vector<1x256xf32> to vector<8x256xf32>
    %176 = arith.mulf %173, %175 : vector<8x256xf32>
    %c8_77 = arith.constant 8 : index
    %c0_78 = arith.constant 0 : index
    %c0_79 = arith.constant 0 : index
    %177 = vector.load %arg4[%c8_77, %c0_78, %c0_79] : memref<9x4x8xf32, #tpu.memory_space<vmem>>, vector<1x4x8xf32>
    %178 = vector.shape_cast %177 : vector<1x4x8xf32> to vector<4x8xf32>
    %cst_80 = arith.constant dense<0.000000e+00> : vector<4x256xf32>
    %179 = tpu.matmul %178, %176, %cst_80 {dimension_numbers = #tpu.dot_dimension_numbers<[1], [0], [0], [1], [0, 0, 1, 1], [], []>} : vector<4x8xf32>, vector<8x256xf32>, vector<4x256xf32> -> vector<4x256xf32>
    %180 = arith.addf %172, %179 : vector<4x256xf32>
    %c0_81 = arith.constant 0 : index
    %c0_82 = arith.constant 0 : index
    %181 = vector.load %arg5[%c0_81, %c0_82] : memref<4x1xf32, #tpu.memory_space<vmem>>, vector<4x1xf32>
    %182 = vector.broadcast %181 : vector<4x1xf32> to vector<4x256xf32>
    %183 = arith.addf %180, %182 : vector<4x256xf32>
    %cst_83 = arith.constant dense<0.000000e+00> : vector<4xf32>
    %184 = vector.multi_reduction <add>, %183, %cst_83 [1] : vector<4x256xf32> to vector<4xf32>
    %185 = vector.shape_cast %184 : vector<4xf32> to vector<4x1xf32>
    %186 = arith.mulf %183, %183 : vector<4x256xf32>
    %cst_84 = arith.constant dense<0.000000e+00> : vector<4xf32>
    %187 = vector.multi_reduction <add>, %186, %cst_84 [1] : vector<4x256xf32> to vector<4xf32>
    %188 = vector.shape_cast %187 : vector<4xf32> to vector<4x1xf32>
    %cst_85 = arith.constant 3.906250e-03 : f32
    %189 = vector.broadcast %cst_85 : f32 to vector<4x1xf32>
    %190 = arith.mulf %185, %189 : vector<4x1xf32>
    %cst_86 = arith.constant 3.906250e-03 : f32
    %191 = vector.broadcast %cst_86 : f32 to vector<4x1xf32>
    %192 = arith.mulf %188, %191 : vector<4x1xf32>
    %193 = arith.mulf %190, %190 : vector<4x1xf32>
    %194 = arith.subf %192, %193 : vector<4x1xf32>
    %cst_87 = arith.constant 0.000000e+00 : f32
    %195 = vector.broadcast %cst_87 : f32 to vector<4x1xf32>
    %196 = arith.maximumf %194, %195 : vector<4x1xf32>
    %197 = vector.broadcast %190 : vector<4x1xf32> to vector<4x256xf32>
    %198 = arith.subf %183, %197 : vector<4x256xf32>
    %cst_88 = arith.constant 9.99999974E-6 : f32
    %199 = vector.broadcast %cst_88 : f32 to vector<4x1xf32>
    %200 = arith.addf %196, %199 : vector<4x1xf32>
    %201 = math.rsqrt %200 : vector<4x1xf32>
    %202 = vector.broadcast %201 : vector<4x1xf32> to vector<4x256xf32>
    %203 = arith.mulf %198, %202 : vector<4x256xf32>
    %cst_89 = arith.constant 0.000000e+00 : f32
    %204 = vector.broadcast %cst_89 : f32 to vector<4x256xf32>
    %205 = arith.cmpf oge, %203, %204 : vector<4x256xf32>
    %cst_90 = arith.constant 0.00999999977 : f32
    %206 = vector.broadcast %cst_90 : f32 to vector<4x256xf32>
    %207 = arith.mulf %206, %203 : vector<4x256xf32>
    %208 = arith.select %205, %203, %207 : vector<4x256xi1>, vector<4x256xf32>
    %c0_91 = arith.constant 0 : index
    %c0_92 = arith.constant 0 : index
    %c0_93 = arith.constant 0 : index
    %209 = vector.load %arg7[%c0_91, %c0_92, %c0_93] : memref<1x4x256xf32, #tpu.memory_space<vmem>>, vector<1x4x256xf32>
    %210 = vector.shape_cast %209 : vector<1x4x256xf32> to vector<4x256xf32>
    %211 = vector.shape_cast %208 : vector<4x256xf32> to vector<1x4x256xf32>
    tpu.vector_store %arg7[%c0_91, %c0_92, %c0_93], %211 {strides = array<i32>} : memref<1x4x256xf32, #tpu.memory_space<vmem>>, vector<1x4x256xf32>,
    return
  }
  func.func @transform_0(%arg0: i32) -> (i32, i32, i32) {
    %c0_i32 = arith.constant 0 : i32
    %c0_i32_0 = arith.constant 0 : i32
    %c0_i32_1 = arith.constant 0 : i32
    return %arg0, %c0_i32, %c0_i32_0 : i32, i32, i32
  }
  func.func @transform_1(%arg0: i32) -> (i32, i32, i32) {
    %c0_i32 = arith.constant 0 : i32
    %c0_i32_0 = arith.constant 0 : i32
    %c0_i32_1 = arith.constant 0 : i32
    %c0_i32_2 = arith.constant 0 : i32
    return %c0_i32, %c0_i32_0, %c0_i32_1 : i32, i32, i32
  }
  func.func @transform_2(%arg0: i32) -> (i32, i32) {
    %c0_i32 = arith.constant 0 : i32
    %c0_i32_0 = arith.constant 0 : i32
    %c0_i32_1 = arith.constant 0 : i32
    return %c0_i32, %c0_i32_0 : i32, i32
  }
  func.func @transform_3(%arg0: i32) -> (i32, i32, i32) {
    %c0_i32 = arith.constant 0 : i32
    %c0_i32_0 = arith.constant 0 : i32
    %c0_i32_1 = arith.constant 0 : i32
    %c0_i32_2 = arith.constant 0 : i32
    return %c0_i32, %c0_i32_0, %c0_i32_1 : i32, i32, i32
  }
  func.func @transform_4(%arg0: i32) -> (i32, i32) {
    %c0_i32 = arith.constant 0 : i32
    %c0_i32_0 = arith.constant 0 : i32
    %c0_i32_1 = arith.constant 0 : i32
    return %c0_i32, %c0_i32_0 : i32, i32
  }
  func.func @transform_5(%arg0: i32) -> (i32, i32) {
    %c0_i32 = arith.constant 0 : i32
    %c0_i32_0 = arith.constant 0 : i32
    %c0_i32_1 = arith.constant 0 : i32
    return %c0_i32, %c0_i32_0 : i32, i32
  }
  func.func @transform_6(%arg0: i32) -> (i32, i32, i32) {
    %c0_i32 = arith.constant 0 : i32
    %c0_i32_0 = arith.constant 0 : i32
    %c0_i32_1 = arith.constant 0 : i32
    return %arg0, %c0_i32, %c0_i32_0 : i32, i32, i32
  }
}

</mosaic_0001>

<llo_original>
// kernel: tpu_custom_call.1
$region0: #{tpu_custom_call.1}
  #allocation0 [shape = 'u32[]', space=smem, size = 0x4, offset = 0x4, fixed_abs, tag = 'smem constant byte address 0x4 - core index']
  #allocation1 [shape = 'u32[144,128]{1,0:T(1,128)}', space=vmem, size = 0x12000, scoped, tag = 'internal scratch']
  %s0 = inlined_call_operand.vmem [shape: f32[2,4,256], index: 0, kind: input, shape index: {}]
  %s1 = inlined_call_operand.vmem [shape: f32[9,8,4], index: 1, kind: input, shape index: {}]
  %s2 = inlined_call_operand.vmem [shape: f32[8,1], index: 2, kind: input, shape index: {}]
  %s3 = inlined_call_operand.vmem [shape: f32[9,4,8], index: 3, kind: input, shape index: {}]
  %s4 = inlined_call_operand.vmem [shape: f32[4,1], index: 4, kind: input, shape index: {}]
  %s5 = inlined_call_operand.vmem [shape: f32[9,256], index: 5, kind: input, shape index: {}]
  %s6 = inlined_call_operand.hbm [shape: f32[2,4,256], index: 6, kind: output, shape index: {}]
  %s7 = sld [smem:[#allocation0]]
  $region57: #{tpu_custom_call.1} parent=0
    _
  %s9 = ssub.s32 1, %s7
  %s10 = scalar_select 0, %s9, %s7
  $region1: #{tpu_custom_call.1} parent=0
    #allocation2 [shape = 'u8[8192]{0}', space=vmem, size = 0x2000, scoped, tag = 'output window, operand 0']
    #allocation3 [shape = 's32[2]{0}', space=sflag, size = 0x8, scoped, tag = 'scoped memory for tpu_custom_call.1']
    %11 = vsyncpa [#allocation3], 0
    %s12 = scalar_lea.sflag [#allocation3], 1
    %13 = vsyncpa %s12, 0
    loop: start=0, step=1, limit=4
    $region2: #{tpu_custom_call.1} parent=1 // loop_pre_header
      _
    $region3: #{tpu_custom_call.1} parent=1 // loop_header
      %s15 = sphi 0, %s19
      %p16 = scmp.ge.s32.totalorder %s15, 4
      %s25 = sphi 0, %s27
      %s28 = sphi 0, %s25
      %s29 = sphi 0, %s28
      %s45 = sphi 0, %s29
      %s49 = sphi 0, %s49
      %s51 = sphi 0, %s49
      %s52 = sphi 0, %s51
      %s66 = sphi 0, %s52
      %s70 = sphi 0, %s70
      %s72 = sphi 0, %s70
      %s73 = sphi 0, %s72
      %s87 = sphi 0, %s73
      %s91 = sphi 0, %s91
      %s93 = sphi 0, %s91
      %s94 = sphi 0, %s93
      %s108 = sphi 0, %s94
      %s112 = sphi 0, %s112
      %s114 = sphi 0, %s112
      %s115 = sphi 0, %s114
      %s129 = sphi 0, %s115
      %s133 = sphi 0, %s133
      %s135 = sphi 0, %s133
      %s136 = sphi 0, %s135
      %s150 = sphi 0, %s136
      %s156 = sphi 0, %s158
      %s159 = sphi 0, %s156
      %s160 = sphi 0, %s159
      %s176 = sphi 0, %s160
    $region4: #{tpu_custom_call.1} parent=1 // loop_header_branch
      %18 = sbr.rel (%p16) target = $region8
    $region5: #{tpu_custom_call.1} parent=1 // loop_body
      %s20 = ssub.s32 %s15, 1
      %s21 = ssub.s32 %s15, 2
      %s22 = sadd.s32 %s15, 1
      %s23 = ssub.s32 %s15, %s22
      %p24 = scmp.eq.s32.totalorder %s23, 0
      %s26 = sadd.s32 %s25, 1
      %s27 = scalar_select %p24, %s25, %s26
      %p30 = pneg %p24
      %p31 = scmp.eq.s32.totalorder %s15, 1
      %p32 = por %p30, %p31
      %p33 = scmp.ne.s32.totalorder %s25, %s28
      %p34 = scmp.eq.s32.totalorder %s15, 0
      %p35 = por %p33, %p34
      %p36 = scmp.ne.s32.totalorder %s25, %s28
      %p37 = scmp.eq.s32.totalorder %s20, 1
      %p38 = por %p36, %p37
      %p39 = scmp.ne.s32.totalorder %s28, %s29
      %p40 = scmp.eq.s32.totalorder %s20, 0
      %p41 = por %p39, %p40
      %p42 = scmp.ne.s32.totalorder %s28, %s29
      %p43 = scmp.eq.s32.totalorder %s21, 1
      %p44 = por %p42, %p43
      %p46 = scmp.ne.s32.totalorder %s29, %s45
      %p47 = scmp.eq.s32.totalorder %s21, 0
      %p48 = por %p46, %p47
      %s50 = sadd.s32 %s49, 1
      %p53 = scmp.eq.s32.totalorder %s15, 1
      %p54 = scmp.ne.s32.totalorder %s49, %s51
      %p55 = scmp.eq.s32.totalorder %s15, 0
      %p56 = por %p54, %p55
      %p57 = scmp.ne.s32.totalorder %s49, %s51
      %p58 = scmp.eq.s32.totalorder %s20, 1
      %p59 = por %p57, %p58
      %p60 = scmp.ne.s32.totalorder %s51, %s52
      %p61 = scmp.eq.s32.totalorder %s20, 0
      %p62 = por %p60, %p61
      %p63 = scmp.ne.s32.totalorder %s51, %s52
      %p64 = scmp.eq.s32.totalorder %s21, 1
      %p65 = por %p63, %p64
      %p67 = scmp.ne.s32.totalorder %s52, %s66
      %p68 = scmp.eq.s32.totalorder %s21, 0
      %p69 = por %p67, %p68
      %s71 = sadd.s32 %s70, 1
      %p74 = scmp.eq.s32.totalorder %s15, 1
      %p75 = scmp.ne.s32.totalorder %s70, %s72
      %p76 = scmp.eq.s32.totalorder %s15, 0
      %p77 = por %p75, %p76
      %p78 = scmp.ne.s32.totalorder %s70, %s72
      %p79 = scmp.eq.s32.totalorder %s20, 1
      %p80 = por %p78, %p79
      %p81 = scmp.ne.s32.totalorder %s72, %s73
      %p82 = scmp.eq.s32.totalorder %s20, 0
      %p83 = por %p81, %p82
      %p84 = scmp.ne.s32.totalorder %s72, %s73
      %p85 = scmp.eq.s32.totalorder %s21, 1
      %p86 = por %p84, %p85
      %p88 = scmp.ne.s32.totalorder %s73, %s87
      %p89 = scmp.eq.s32.totalorder %s21, 0
      %p90 = por %p88, %p89
      %s92 = sadd.s32 %s91, 1
      %p95 = scmp.eq.s32.totalorder %s15, 1
      %p96 = scmp.ne.s32.totalorder %s91, %s93
      %p97 = scmp.eq.s32.totalorder %s15, 0
      %p98 = por %p96, %p97
      %p99 = scmp.ne.s32.totalorder %s91, %s93
      %p100 = scmp.eq.s32.totalorder %s20, 1
      %p101 = por %p99, %p100
      %p102 = scmp.ne.s32.totalorder %s93, %s94
      %p103 = scmp.eq.s32.totalorder %s20, 0
      %p104 = por %p102, %p103
      %p105 = scmp.ne.s32.totalorder %s93, %s94
      %p106 = scmp.eq.s32.totalorder %s21, 1
      %p107 = por %p105, %p106
      %p109 = scmp.ne.s32.totalorder %s94, %s108
      %p110 = scmp.eq.s32.totalorder %s21, 0
      %p111 = por %p109, %p110
      %s113 = sadd.s32 %s112, 1
      %p116 = scmp.eq.s32.totalorder %s15, 1
      %p117 = scmp.ne.s32.totalorder %s112, %s114
      %p118 = scmp.eq.s32.totalorder %s15, 0
      %p119 = por %p117, %p118
      %p120 = scmp.ne.s32.totalorder %s112, %s114
      %p121 = scmp.eq.s32.totalorder %s20, 1
      %p122 = por %p120, %p121
      %p123 = scmp.ne.s32.totalorder %s114, %s115
      %p124 = scmp.eq.s32.totalorder %s20, 0
      %p125 = por %p123, %p124
      %p126 = scmp.ne.s32.totalorder %s114, %s115
      %p127 = scmp.eq.s32.totalorder %s21, 1
      %p128 = por %p126, %p127
      %p130 = scmp.ne.s32.totalorder %s115, %s129
      %p131 = scmp.eq.s32.totalorder %s21, 0
      %p132 = por %p130, %p131
      %s134 = sadd.s32 %s133, 1
      %p137 = scmp.eq.s32.totalorder %s15, 1
      %p138 = scmp.ne.s32.totalorder %s133, %s135
      %p139 = scmp.eq.s32.totalorder %s15, 0
      %p140 = por %p138, %p139
      %p141 = scmp.ne.s32.totalorder %s133, %s135
      %p142 = scmp.eq.s32.totalorder %s20, 1
      %p143 = por %p141, %p142
      %p144 = scmp.ne.s32.totalorder %s135, %s136
      %p145 = scmp.eq.s32.totalorder %s20, 0
      %p146 = por %p144, %p145
      %p147 = scmp.ne.s32.totalorder %s135, %s136
      %p148 = scmp.eq.s32.totalorder %s21, 1
      %p149 = por %p147, %p148
      %p151 = scmp.ne.s32.totalorder %s136, %s150
      %p152 = scmp.eq.s32.totalorder %s21, 0
      %p153 = por %p151, %p152
      %s154 = ssub.s32 %s15, %s22
      %p155 = scmp.eq.s32.totalorder %s154, 0
      %s157 = sadd.s32 %s156, 1
      %s158 = scalar_select %p155, %s156, %s157
      %p161 = pneg %p155
      %p162 = scmp.eq.s32.totalorder %s15, 1
      %p163 = por %p161, %p162
      %p164 = scmp.ne.s32.totalorder %s156, %s159
      %p165 = scmp.eq.s32.totalorder %s15, 0
      %p166 = por %p164, %p165
      %p167 = scmp.ne.s32.totalorder %s156, %s159
      %p168 = scmp.eq.s32.totalorder %s20, 1
      %p169 = por %p167, %p168
      %p170 = scmp.ne.s32.totalorder %s159, %s160
      %p171 = scmp.eq.s32.totalorder %s20, 0
      %p172 = por %p170, %p171
      %p173 = scmp.ne.s32.totalorder %s159, %s160
      %p174 = scmp.eq.s32.totalorder %s21, 1
      %p175 = por %p173, %p174
      %p177 = scmp.ne.s32.totalorder %s160, %s176
      %p178 = scmp.eq.s32.totalorder %s21, 0
      %p179 = por %p177, %p178
      %p180 = scmp.le.s32.totalorder 1, %s15
      %p181 = scmp.lt.s32.totalorder %s15, 3
      %p182 = pnand %p180, %p181
      %p183 = pneg %p182
      // Predicated region
      $region9: #{tpu_custom_call.1} parent=5 // pred_check
        _
      $region10: #{tpu_custom_call.1} parent=5 // pred_check_branch
        %185 = sbr.rel (%p182) target = $region12
      $region11: #{tpu_custom_call.1} parent=5 // pred_region
        %s186 = ssub.s32 %s15, 1
        // Predicated region
        $region13: #{tpu_custom_call.1} parent=11 // pred_check
          %p187 = pneg %p62
        $region14: #{tpu_custom_call.1} parent=11 // pred_check_branch
          %189 = sbr.rel (%p187) target = $region16
        $region15: #{tpu_custom_call.1} parent=11 // pred_region
          _
        $region16: #{tpu_custom_call.1} parent=11 // pred_fallthru
          _
        // Predicated region
        $region17: #{tpu_custom_call.1} parent=11 // pred_check
          %p190 = pneg %p83
        $region18: #{tpu_custom_call.1} parent=11 // pred_check_branch
          %192 = sbr.rel (%p190) target = $region20
        $region19: #{tpu_custom_call.1} parent=11 // pred_region
          _
        $region20: #{tpu_custom_call.1} parent=11 // pred_fallthru
          _
        // Predicated region
        $region21: #{tpu_custom_call.1} parent=11 // pred_check
          %p193 = pneg %p104
        $region22: #{tpu_custom_call.1} parent=11 // pred_check_branch
          %195 = sbr.rel (%p193) target = $region24
        $region23: #{tpu_custom_call.1} parent=11 // pred_region
          _
        $region24: #{tpu_custom_call.1} parent=11 // pred_fallthru
          _
        // Predicated region
        $region25: #{tpu_custom_call.1} parent=11 // pred_check
          %p196 = pneg %p125
        $region26: #{tpu_custom_call.1} parent=11 // pred_check_branch
          %198 = sbr.rel (%p196) target = $region28
        $region27: #{tpu_custom_call.1} parent=11 // pred_region
          _
        $region28: #{tpu_custom_call.1} parent=11 // pred_fallthru
          _
        // Predicated region
        $region29: #{tpu_custom_call.1} parent=11 // pred_check
          %p199 = pneg %p146
        $region30: #{tpu_custom_call.1} parent=11 // pred_check_branch
          %201 = sbr.rel (%p199) target = $region32
        $region31: #{tpu_custom_call.1} parent=11 // pred_region
          _
        $region32: #{tpu_custom_call.1} parent=11 // pred_fallthru
          _
      $region12: #{tpu_custom_call.1} parent=5 // pred_fallthru
        _
      %p202 = scmp.lt.s32.totalorder %s15, 2
      // Predicated region
      $region33: #{tpu_custom_call.1} parent=5 // pred_check
        %p203 = pneg %p202
      $region34: #{tpu_custom_call.1} parent=5 // pred_check_branch
        %205 = sbr.rel (%p203) target = $region36
      $region35: #{tpu_custom_call.1} parent=5 // pred_region
        // Predicated region
        $region37: #{tpu_custom_call.1} parent=35 // pred_check
          %p206 = pneg %p35
        $region38: #{tpu_custom_call.1} parent=35 // pred_check_branch
          %208 = sbr.rel (%p206) target = $region40
        $region39: #{tpu_custom_call.1} parent=35 // pred_region
          %p209 = scmp.lt.s32.totalorder %s15, 1
          %s210 = scalar_select %p209, %s15, 1
          %s211 = smul.addr %s210, 2
          %s212 = smul.addr %s211, 4
          %s213 = scalar_lea.vmem %s0, %s212
        $region40: #{tpu_custom_call.1} parent=35 // pred_fallthru
          _
      $region36: #{tpu_custom_call.1} parent=5 // pred_fallthru
        _
      %p214 = scmp.le.s32.totalorder 1, %s15
      %p215 = scmp.lt.s32.totalorder %s15, 3
      %p216 = pnand %p214, %p215
      %p217 = pneg %p216
      // Predicated region
      $region41: #{tpu_custom_call.1} parent=5 // pred_check
        _
      $region42: #{tpu_custom_call.1} parent=5 // pred_check_branch
        %219 = sbr.rel (%p216) target = $region44
      $region43: #{tpu_custom_call.1} parent=5 // pred_region
        %s220 = ssub.s32 %s15, 1
        %p221 = scmp.lt.s32.totalorder %s20, 1
        %s222 = scalar_select %p221, %s20, 1
        %s223 = smul.addr %s222, 2
        %s224 = smul.addr %s223, 4
        %s225 = scalar_lea.vmem %s0, %s224
        %p226 = pneg %p41
        %p227 = pneg %p38
        %p228 = pneg %p62
        %p229 = pneg %p59
        %p230 = pneg %p83
        %p231 = pneg %p80
        %p232 = pneg %p104
        %p233 = pneg %p101
        %p234 = pneg %p125
        %p235 = pneg %p122
        %p236 = pneg %p146
        %p237 = pneg %p143
        %p238 = pneg %p172
        %p239 = pneg %p169
        %s240 = sand.u32 %s159, 1
        %s241 = scalar_lea.sflag [#allocation3], %s240
        %s242 = sand.u32 %s159, 1
        %s243 = smul.addr %s242, 8
        %s244 = scalar_lea.vmem [#allocation2], %s243
        %p245 = scmp.lt.s32.totalorder %s20, 1
        %s246 = scalar_select %p245, %s20, 1
        %s247 = smul.addr %s246, 2
        %s248 = smul.addr %s247, 4
        %s249 = scalar_lea.vmem %s0, %s248
        %v250 = vld [vmem:[%s5] sm:$0xff]
        %v251 = vld [vmem:[%s5 + $0x8] sm:$0xff]
        %v252 = vld [vmem:[%s5 + $0x10] sm:$0x1]
        %v253 = vld [vmem:[%s5 + $0x18] sm:$0x1]
        %v254 = vld [vmem:[%s249] sm:$0xff]
        %v256 = vcombine.high %v254, %v254
        %v258 = vlaneseq
        %v259 = vshrl.u32 %v258, 7
        %v260 = vsub.s32 0, %v259
        %v261 = vrot.slane %v250, %v260
        %v262 = vlaneseq
        %v263 = vshrl.u32 %v262, 7
        %v264 = vsub.s32 0, %v263
        %v265 = vrot.slane %v251, %v264
        %268 = vrot.lane.b32.xlu0 %v261, 111
        %v269 = vpop.permute.xlu0 %268
        %270 = vrot.lane.b32.xlu0 %v265, 111
        %v271 = vpop.permute.xlu0 %270
        %vm272 = vcmask 908288
        %v273 = vsel %vm272, %v269, %v271
        %v277 = vmul.f32 %v269, 0.0
        %v278 = vmul.f32 %v254, %v273
        %v279 = vmul.f32 %v256, %v271
        %v280 = vld [vmem:[%s1] sm:$0xff]
        %v281 = vlaneseq
        %v282 = vshrl.u32 %v281, 7
        %v283 = vsub.s32 1, %v282
        %v284 = vrot.slane %v250, %v283
        %v285 = vlaneseq
        %v286 = vshrl.u32 %v285, 7
        %v287 = vsub.s32 1, %v286
        %v288 = vrot.slane %v251, %v287
        %291 = vrot.lane.b32.xlu0 %v284, 112
        %v292 = vpop.permute.xlu0 %291
        %293 = vrot.lane.b32.xlu0 %v288, 112
        %v294 = vpop.permute.xlu0 %293
        %vm295 = vcmask 916480
        %v296 = vsel %vm295, %v292, %v294
        %v300 = vmul.f32 %v292, 0.0
        %v301 = vmul.f32 %v254, %v296
        %v302 = vmul.f32 %v256, %v294
        %s303 = scalar_lea.vmem %s1, 8
        %v304 = vld [vmem:[%s303] sm:$0xff]
        %308 = vrot.lane.b32.xlu0 %v300, 16
        %v309 = vpop.permute.xlu0 %308
        %310 = vrot.lane.b32.xlu0 %v301, 16
        %v311 = vpop.permute.xlu0 %310
        %312 = vrot.lane.b32.xlu0 %v302, 16
        %v313 = vpop.permute.xlu0 %312
        %vm314 = vcmask 130048
        %v315 = vsel %vm314, %v309, %v311
        %v316 = vsel %vm314, %v311, %v313
        %vm317 = vcmask 31744
        %v319 = vsel %vm317, %v304, 0
        %vm321 = vcmask 1043456
        %v322 = vsel %vm321, %v315, 0
        %v324 = vsel %vm321, %v316, 0
        %326 = vmatprep.subr.mxu0 %v324
        %327 = vmatpush1.msra.mxu0 %v322
        %328 = vmatprep.subr.mxu0 0.0
        %329 = vmatpush1.msra.mxu0 0.0
        %330 = vmatprep.subr.mxu0 0.0
        %331 = vmatpush1.msra.mxu0 0.0
        %332 = vmatprep.subr.mxu0 0.0
        %333 = vmatpush1.msra.mxu0 0.0
        %334 = vmatprep.subr.mxu0 0.0
        %335 = vmatpush1.msra.mxu0 0.0
        %336 = vmatprep.subr.mxu0 0.0
        %337 = vmatpush1.msra.mxu0 0.0
        %338 = vmatprep.subr.mxu0 0.0
        %339 = vmatpush1.msra.mxu0 0.0
        %340 = vmatprep.subr.mxu0 0.0
        %341 = vmatpush1.msra.mxu0 0.0
        %342 = vmatprep.subr.mxu0 0.0
        %343 = vmatpush1.msra.mxu0 0.0
        %344 = vmatprep.subr.mxu0 0.0
        %345 = vmatpush1.msra.mxu0 0.0
        %346 = vmatprep.subr.mxu0 0.0
        %347 = vmatpush1.msra.mxu0 0.0
        %348 = vmatprep.subr.mxu0 0.0
        %349 = vmatpush1.msra.mxu0 0.0
        %350 = vmatprep.subr.mxu0 0.0
        %351 = vmatpush1.msra.mxu0 0.0
        %352 = vmatprep.subr.mxu0 0.0
        %353 = vmatpush1.msra.mxu0 0.0
        %354 = vmatprep.subr.mxu0 0.0
        %355 = vmatpush1.msra.mxu0 0.0
        %356 = vmatprep.subr.mxu0 0.0
        %357 = vmatpush1.msra.mxu0 0.0
        %358 = vmatprep.subr.mxu0 0.0
        %359 = vmatpush1.msra.mxu0 0.0
        %360 = vmatprep.subr.mxu0 0.0
        %361 = vmatpush1.msra.mxu0 0.0
        %362 = vmatprep.subr.mxu0 0.0
        %363 = vmatpush1.msra.mxu0 0.0
        %364 = vmatprep.subr.mxu0 0.0
        %365 = vmatpush1.msra.mxu0 0.0
        %366 = vmatprep.subr.mxu0 0.0
        %367 = vmatpush1.msra.mxu0 0.0
        %368 = vmatprep.subr.mxu0 0.0
        %369 = vmatpush1.msra.mxu0 0.0
        %370 = vmatprep.subr.mxu0 0.0
        %371 = vmatpush1.msra.mxu0 0.0
        %372 = vmatprep.subr.mxu0 0.0
        %373 = vmatpush1.msra.mxu0 0.0
        %374 = vmatprep.subr.mxu0 0.0
        %375 = vmatpush1.msra.mxu0 0.0
        %376 = vmatprep.subr.mxu0 0.0
        %377 = vmatpush1.msra.mxu0 0.0
        %378 = vmatprep.subr.mxu0 0.0
        %379 = vmatpush1.msra.mxu0 0.0
        %380 = vmatprep.subr.mxu0 0.0
        %381 = vmatpush1.msra.mxu0 0.0
        %382 = vmatprep.subr.mxu0 0.0
        %383 = vmatpush1.msra.mxu0 0.0
        %384 = vmatprep.subr.mxu0 0.0
        %385 = vmatpush1.msra.mxu0 0.0
        %386 = vmatprep.subr.mxu0 0.0
        %387 = vmatpush1.msra.mxu0 0.0
        %388 = vmatprep.subr.mxu0 0.0
        %389 = vmatpush1.msra.mxu0 0.0
        %390 = vmatprep.mubr.f32.mxu0 0.0
        %391 = vmatmul.mubr.f32.gmra.mrb[0].mxu0 %v319
        %v392 = vpop.f32.mrb[0].mxu0
        %v393 = vadd.f32 0.0, %v392
        %v394 = vpop.f32.mrb[0].mxu0
        %v395 = vadd.f32 0.0, %v394
        %396 = vdwg.mxu0
        %400 = vrot.lane.b32.xlu0 %v277, 17
        %v401 = vpop.permute.xlu0 %400
        %402 = vrot.lane.b32.xlu0 %v278, 17
        %v403 = vpop.permute.xlu0 %402
        %404 = vrot.lane.b32.xlu0 %v279, 17
        %v405 = vpop.permute.xlu0 %404
        %vm406 = vcmask 138240
        %v407 = vsel %vm406, %v401, %v403
        %v408 = vsel %vm406, %v403, %v405
        %v410 = vsel %vm317, %v280, 0
        %v412 = vsel %vm321, %v407, 0
        %v414 = vsel %vm321, %v408, 0
        %416 = vmatprep.subr.mxu0 %v414
        %417 = vmatpush1.msra.mxu0 %v412
        %418 = vmatprep.subr.mxu0 0.0
        %419 = vmatpush1.msra.mxu0 0.0
        %420 = vmatprep.subr.mxu0 0.0
        %421 = vmatpush1.msra.mxu0 0.0
        %422 = vmatprep.subr.mxu0 0.0
        %423 = vmatpush1.msra.mxu0 0.0
        %424 = vmatprep.subr.mxu0 0.0
        %425 = vmatpush1.msra.mxu0 0.0
        %426 = vmatprep.subr.mxu0 0.0
        %427 = vmatpush1.msra.mxu0 0.0
        %428 = vmatprep.subr.mxu0 0.0
        %429 = vmatpush1.msra.mxu0 0.0
        %430 = vmatprep.subr.mxu0 0.0
        %431 = vmatpush1.msra.mxu0 0.0
        %432 = vmatprep.subr.mxu0 0.0
        %433 = vmatpush1.msra.mxu0 0.0
        %434 = vmatprep.subr.mxu0 0.0
        %435 = vmatpush1.msra.mxu0 0.0
        %436 = vmatprep.subr.mxu0 0.0
        %437 = vmatpush1.msra.mxu0 0.0
        %438 = vmatprep.subr.mxu0 0.0
        %439 = vmatpush1.msra.mxu0 0.0
        %440 = vmatprep.subr.mxu0 0.0
        %441 = vmatpush1.msra.mxu0 0.0
        %442 = vmatprep.subr.mxu0 0.0
        %443 = vmatpush1.msra.mxu0 0.0
        %444 = vmatprep.subr.mxu0 0.0
        %445 = vmatpush1.msra.mxu0 0.0
        %446 = vmatprep.subr.mxu0 0.0
        %447 = vmatpush1.msra.mxu0 0.0
        %448 = vmatprep.subr.mxu0 0.0
        %449 = vmatpush1.msra.mxu0 0.0
        %450 = vmatprep.subr.mxu0 0.0
        %451 = vmatpush1.msra.mxu0 0.0
        %452 = vmatprep.subr.mxu0 0.0
        %453 = vmatpush1.msra.mxu0 0.0
        %454 = vmatprep.subr.mxu0 0.0
        %455 = vmatpush1.msra.mxu0 0.0
        %456 = vmatprep.subr.mxu0 0.0
        %457 = vmatpush1.msra.mxu0 0.0
        %458 = vmatprep.subr.mxu0 0.0
        %459 = vmatpush1.msra.mxu0 0.0
        %460 = vmatprep.subr.mxu0 0.0
        %461 = vmatpush1.msra.mxu0 0.0
        %462 = vmatprep.subr.mxu0 0.0
        %463 = vmatpush1.msra.mxu0 0.0
        %464 = vmatprep.subr.mxu0 0.0
        %465 = vmatpush1.msra.mxu0 0.0
        %466 = vmatprep.subr.mxu0 0.0
        %467 = vmatpush1.msra.mxu0 0.0
        %468 = vmatprep.subr.mxu0 0.0
        %469 = vmatpush1.msra.mxu0 0.0
        %470 = vmatprep.subr.mxu0 0.0
        %471 = vmatpush1.msra.mxu0 0.0
        %472 = vmatprep.subr.mxu0 0.0
        %473 = vmatpush1.msra.mxu0 0.0
        %474 = vmatprep.subr.mxu0 0.0
        %475 = vmatpush1.msra.mxu0 0.0
        %476 = vmatprep.subr.mxu0 0.0
        %477 = vmatpush1.msra.mxu0 0.0
        %478 = vmatprep.subr.mxu0 0.0
        %479 = vmatpush1.msra.mxu0 0.0
        %480 = vmatprep.mubr.f32.mxu0 0.0
        %481 = vmatmul.mubr.f32.gmra.mrb[0].mxu0 %v410
        %v482 = vpop.f32.mrb[0].mxu0
        %v483 = vadd.f32 %v393, %v482
        %v484 = vpop.f32.mrb[0].mxu0
        %v485 = vadd.f32 %v395, %v484
        %486 = vdwg.mxu0
        %v487 = vlaneseq
        %v488 = vshrl.u32 %v487, 7
        %v489 = vsub.s32 2, %v488
        %v490 = vrot.slane %v250, %v489
        %v491 = vlaneseq
        %v492 = vshrl.u32 %v491, 7
        %v493 = vsub.s32 2, %v492
        %v494 = vrot.slane %v251, %v493
        %497 = vrot.lane.b32.xlu0 %v490, 113
        %v498 = vpop.permute.xlu0 %497
        %499 = vrot.lane.b32.xlu0 %v494, 113
        %v500 = vpop.permute.xlu0 %499
        %vm501 = vcmask 924672
        %v502 = vsel %vm501, %v498, %v500
        %v506 = vmul.f32 %v498, 0.0
        %v507 = vmul.f32 %v254, %v502
        %v508 = vmul.f32 %v256, %v500
        %s509 = scalar_lea.vmem %s1, 16
        %v510 = vld [vmem:[%s509] sm:$0xff]
        %514 = vrot.lane.b32.xlu0 %v506, 15
        %v515 = vpop.permute.xlu0 %514
        %516 = vrot.lane.b32.xlu0 %v507, 15
        %v517 = vpop.permute.xlu0 %516
        %518 = vrot.lane.b32.xlu0 %v508, 15
        %v519 = vpop.permute.xlu0 %518
        %vm520 = vcmask 121856
        %v521 = vsel %vm520, %v515, %v517
        %v522 = vsel %vm520, %v517, %v519
        %v524 = vsel %vm317, %v510, 0
        %v526 = vsel %vm321, %v521, 0
        %v528 = vsel %vm321, %v522, 0
        %530 = vmatprep.subr.mxu0 %v528
        %531 = vmatpush1.msra.mxu0 %v526
        %532 = vmatprep.subr.mxu0 0.0
        %533 = vmatpush1.msra.mxu0 0.0
        %534 = vmatprep.subr.mxu0 0.0
        %535 = vmatpush1.msra.mxu0 0.0
        %536 = vmatprep.subr.mxu0 0.0
        %537 = vmatpush1.msra.mxu0 0.0
        %538 = vmatprep.subr.mxu0 0.0
        %539 = vmatpush1.msra.mxu0 0.0
        %540 = vmatprep.subr.mxu0 0.0
        %541 = vmatpush1.msra.mxu0 0.0
        %542 = vmatprep.subr.mxu0 0.0
        %543 = vmatpush1.msra.mxu0 0.0
        %544 = vmatprep.subr.mxu0 0.0
        %545 = vmatpush1.msra.mxu0 0.0
        %546 = vmatprep.subr.mxu0 0.0
        %547 = vmatpush1.msra.mxu0 0.0
        %548 = vmatprep.subr.mxu0 0.0
        %549 = vmatpush1.msra.mxu0 0.0
        %550 = vmatprep.subr.mxu0 0.0
        %551 = vmatpush1.msra.mxu0 0.0
        %552 = vmatprep.subr.mxu0 0.0
        %553 = vmatpush1.msra.mxu0 0.0
        %554 = vmatprep.subr.mxu0 0.0
        %555 = vmatpush1.msra.mxu0 0.0
        %556 = vmatprep.subr.mxu0 0.0
        %557 = vmatpush1.msra.mxu0 0.0
        %558 = vmatprep.subr.mxu0 0.0
        %559 = vmatpush1.msra.mxu0 0.0
        %560 = vmatprep.subr.mxu0 0.0
        %561 = vmatpush1.msra.mxu0 0.0
        %562 = vmatprep.subr.mxu0 0.0
        %563 = vmatpush1.msra.mxu0 0.0
        %564 = vmatprep.subr.mxu0 0.0
        %565 = vmatpush1.msra.mxu0 0.0
        %566 = vmatprep.subr.mxu0 0.0
        %567 = vmatpush1.msra.mxu0 0.0
        %568 = vmatprep.subr.mxu0 0.0
        %569 = vmatpush1.msra.mxu0 0.0
        %570 = vmatprep.subr.mxu0 0.0
        %571 = vmatpush1.msra.mxu0 0.0
        %572 = vmatprep.subr.mxu0 0.0
        %573 = vmatpush1.msra.mxu0 0.0
        %574 = vmatprep.subr.mxu0 0.0
        %575 = vmatpush1.msra.mxu0 0.0
        %576 = vmatprep.subr.mxu0 0.0
        %577 = vmatpush1.msra.mxu0 0.0
        %578 = vmatprep.subr.mxu0 0.0
        %579 = vmatpush1.msra.mxu0 0.0
        %580 = vmatprep.subr.mxu0 0.0
        %581 = vmatpush1.msra.mxu0 0.0
        %582 = vmatprep.subr.mxu0 0.0
        %583 = vmatpush1.msra.mxu0 0.0
        %584 = vmatprep.subr.mxu0 0.0
        %585 = vmatpush1.msra.mxu0 0.0
        %586 = vmatprep.subr.mxu0 0.0
        %587 = vmatpush1.msra.mxu0 0.0
        %588 = vmatprep.subr.mxu0 0.0
        %589 = vmatpush1.msra.mxu0 0.0
        %590 = vmatprep.subr.mxu0 0.0
        %591 = vmatpush1.msra.mxu0 0.0
        %592 = vmatprep.subr.mxu0 0.0
        %593 = vmatpush1.msra.mxu0 0.0
        %594 = vmatprep.mubr.f32.mxu0 0.0
        %595 = vmatmul.mubr.f32.gmra.mrb[0].mxu0 %v524
        %v596 = vpop.f32.mrb[0].mxu0
        %v597 = vadd.f32 0.0, %v596
        %v598 = vpop.f32.mrb[0].mxu0
        %v599 = vadd.f32 0.0, %v598
        %600 = vdwg.mxu0
        %v601 = vadd.f32 %v483, %v597
        %v602 = vadd.f32 %v485, %v599
        %v603 = vlaneseq
        %v604 = vshrl.u32 %v603, 7
        %v605 = vsub.s32 3, %v604
        %v606 = vrot.slane %v250, %v605
        %v607 = vlaneseq
        %v608 = vshrl.u32 %v607, 7
        %v609 = vsub.s32 3, %v608
        %v610 = vrot.slane %v251, %v609
        %613 = vrot.lane.b32.xlu0 %v606, 127
        %v614 = vpop.permute.xlu0 %613
        %615 = vrot.lane.b32.xlu0 %v610, 127
        %v616 = vpop.permute.xlu0 %615
        %vm617 = vcmask 1039360
        %v618 = vsel %vm617, %v614, %v616
        %v622 = vmul.f32 %v614, 0.0
        %v623 = vmul.f32 %v254, %v618
        %v624 = vmul.f32 %v256, %v616
        %s625 = scalar_lea.vmem %s1, 24
        %v626 = vld [vmem:[%s625] sm:$0xff]
        %630 = vrot.lane.b32.xlu0 %v622, 1
        %v631 = vpop.permute.xlu0 %630
        %632 = vrot.lane.b32.xlu0 %v623, 1
        %v633 = vpop.permute.xlu0 %632
        %634 = vrot.lane.b32.xlu0 %v624, 1
        %v635 = vpop.permute.xlu0 %634
        %vm636 = vcmask 7168
        %v637 = vsel %vm636, %v631, %v633
        %v638 = vsel %vm636, %v633, %v635
        %v640 = vsel %vm317, %v626, 0
        %v642 = vsel %vm321, %v637, 0
        %v644 = vsel %vm321, %v638, 0
        %646 = vmatprep.subr.mxu0 %v644
        %647 = vmatpush1.msra.mxu0 %v642
        %648 = vmatprep.subr.mxu0 0.0
        %649 = vmatpush1.msra.mxu0 0.0
        %650 = vmatprep.subr.mxu0 0.0
        %651 = vmatpush1.msra.mxu0 0.0
        %652 = vmatprep.subr.mxu0 0.0
        %653 = vmatpush1.msra.mxu0 0.0
        %654 = vmatprep.subr.mxu0 0.0
        %655 = vmatpush1.msra.mxu0 0.0
        %656 = vmatprep.subr.mxu0 0.0
        %657 = vmatpush1.msra.mxu0 0.0
        %658 = vmatprep.subr.mxu0 0.0
        %659 = vmatpush1.msra.mxu0 0.0
        %660 = vmatprep.subr.mxu0 0.0
        %661 = vmatpush1.msra.mxu0 0.0
        %662 = vmatprep.subr.mxu0 0.0
        %663 = vmatpush1.msra.mxu0 0.0
        %664 = vmatprep.subr.mxu0 0.0
        %665 = vmatpush1.msra.mxu0 0.0
        %666 = vmatprep.subr.mxu0 0.0
        %667 = vmatpush1.msra.mxu0 0.0
        %668 = vmatprep.subr.mxu0 0.0
        %669 = vmatpush1.msra.mxu0 0.0
        %670 = vmatprep.subr.mxu0 0.0
        %671 = vmatpush1.msra.mxu0 0.0
        %672 = vmatprep.subr.mxu0 0.0
        %673 = vmatpush1.msra.mxu0 0.0
        %674 = vmatprep.subr.mxu0 0.0
        %675 = vmatpush1.msra.mxu0 0.0
        %676 = vmatprep.subr.mxu0 0.0
        %677 = vmatpush1.msra.mxu0 0.0
        %678 = vmatprep.subr.mxu0 0.0
        %679 = vmatpush1.msra.mxu0 0.0
        %680 = vmatprep.subr.mxu0 0.0
        %681 = vmatpush1.msra.mxu0 0.0
        %682 = vmatprep.subr.mxu0 0.0
        %683 = vmatpush1.msra.mxu0 0.0
        %684 = vmatprep.subr.mxu0 0.0
        %685 = vmatpush1.msra.mxu0 0.0
        %686 = vmatprep.subr.mxu0 0.0
        %687 = vmatpush1.msra.mxu0 0.0
        %688 = vmatprep.subr.mxu0 0.0
        %689 = vmatpush1.msra.mxu0 0.0
        %690 = vmatprep.subr.mxu0 0.0
        %691 = vmatpush1.msra.mxu0 0.0
        %692 = vmatprep.subr.mxu0 0.0
        %693 = vmatpush1.msra.mxu0 0.0
        %694 = vmatprep.subr.mxu0 0.0
        %695 = vmatpush1.msra.mxu0 0.0
        %696 = vmatprep.subr.mxu0 0.0
        %697 = vmatpush1.msra.mxu0 0.0
        %698 = vmatprep.subr.mxu0 0.0
        %699 = vmatpush1.msra.mxu0 0.0
        %700 = vmatprep.subr.mxu0 0.0
        %701 = vmatpush1.msra.mxu0 0.0
        %702 = vmatprep.subr.mxu0 0.0
        %703 = vmatpush1.msra.mxu0 0.0
        %704 = vmatprep.subr.mxu0 0.0
        %705 = vmatpush1.msra.mxu0 0.0
        %706 = vmatprep.subr.mxu0 0.0
        %707 = vmatpush1.msra.mxu0 0.0
        %708 = vmatprep.subr.mxu0 0.0
        %709 = vmatpush1.msra.mxu0 0.0
        %710 = vmatprep.mubr.f32.mxu0 0.0
        %711 = vmatmul.mubr.f32.gmra.mrb[0].mxu0 %v640
        %v712 = vpop.f32.mrb[0].mxu0
        %v713 = vadd.f32 0.0, %v712
        %v714 = vpop.f32.mrb[0].mxu0
        %v715 = vadd.f32 0.0, %v714
        %716 = vdwg.mxu0
        %v717 = vadd.f32 %v601, %v713
        %v718 = vadd.f32 %v602, %v715
        %v719 = vlaneseq
        %v720 = vshrl.u32 %v719, 7
        %v721 = vsub.s32 4, %v720
        %v722 = vrot.slane %v250, %v721
        %v723 = vlaneseq
        %v724 = vshrl.u32 %v723, 7
        %v725 = vsub.s32 4, %v724
        %v726 = vrot.slane %v251, %v725
        %v727 = vmul.f32 %v254, %v722
        %v728 = vmul.f32 %v256, %v726
        %s729 = scalar_lea.vmem %s1, 32
        %v730 = vld [vmem:[%s729] sm:$0xff]
        %v732 = vsel %vm317, %v730, 0
        %v735 = vsel %vm321, %v727, 0
        %v738 = vsel %vm321, %v728, 0
        %740 = vmatprep.subr.mxu0 %v738
        %741 = vmatpush1.msra.mxu0 %v735
        %742 = vmatprep.subr.mxu0 0.0
        %743 = vmatpush1.msra.mxu0 0.0
        %744 = vmatprep.subr.mxu0 0.0
        %745 = vmatpush1.msra.mxu0 0.0
        %746 = vmatprep.subr.mxu0 0.0
        %747 = vmatpush1.msra.mxu0 0.0
        %748 = vmatprep.subr.mxu0 0.0
        %749 = vmatpush1.msra.mxu0 0.0
        %750 = vmatprep.subr.mxu0 0.0
        %751 = vmatpush1.msra.mxu0 0.0
        %752 = vmatprep.subr.mxu0 0.0
        %753 = vmatpush1.msra.mxu0 0.0
        %754 = vmatprep.subr.mxu0 0.0
        %755 = vmatpush1.msra.mxu0 0.0
        %756 = vmatprep.subr.mxu0 0.0
        %757 = vmatpush1.msra.mxu0 0.0
        %758 = vmatprep.subr.mxu0 0.0
        %759 = vmatpush1.msra.mxu0 0.0
        %760 = vmatprep.subr.mxu0 0.0
        %761 = vmatpush1.msra.mxu0 0.0
        %762 = vmatprep.subr.mxu0 0.0
        %763 = vmatpush1.msra.mxu0 0.0
        %764 = vmatprep.subr.mxu0 0.0
        %765 = vmatpush1.msra.mxu0 0.0
        %766 = vmatprep.subr.mxu0 0.0
        %767 = vmatpush1.msra.mxu0 0.0
        %768 = vmatprep.subr.mxu0 0.0
        %769 = vmatpush1.msra.mxu0 0.0
        %770 = vmatprep.subr.mxu0 0.0
        %771 = vmatpush1.msra.mxu0 0.0
        %772 = vmatprep.subr.mxu0 0.0
        %773 = vmatpush1.msra.mxu0 0.0
        %774 = vmatprep.subr.mxu0 0.0
        %775 = vmatpush1.msra.mxu0 0.0
        %776 = vmatprep.subr.mxu0 0.0
        %777 = vmatpush1.msra.mxu0 0.0
        %778 = vmatprep.subr.mxu0 0.0
        %779 = vmatpush1.msra.mxu0 0.0
        %780 = vmatprep.subr.mxu0 0.0
        %781 = vmatpush1.msra.mxu0 0.0
        %782 = vmatprep.subr.mxu0 0.0
        %783 = vmatpush1.msra.mxu0 0.0
        %784 = vmatprep.subr.mxu0 0.0
        %785 = vmatpush1.msra.mxu0 0.0
        %786 = vmatprep.subr.mxu0 0.0
        %787 = vmatpush1.msra.mxu0 0.0
        %788 = vmatprep.subr.mxu0 0.0
        %789 = vmatpush1.msra.mxu0 0.0
        %790 = vmatprep.subr.mxu0 0.0
        %791 = vmatpush1.msra.mxu0 0.0
        %792 = vmatprep.subr.mxu0 0.0
        %793 = vmatpush1.msra.mxu0 0.0
        %794 = vmatprep.subr.mxu0 0.0
        %795 = vmatpush1.msra.mxu0 0.0
        %796 = vmatprep.subr.mxu0 0.0
        %797 = vmatpush1.msra.mxu0 0.0
        %798 = vmatprep.subr.mxu0 0.0
        %799 = vmatpush1.msra.mxu0 0.0
        %800 = vmatprep.subr.mxu0 0.0
        %801 = vmatpush1.msra.mxu0 0.0
        %802 = vmatprep.subr.mxu0 0.0
        %803 = vmatpush1.msra.mxu0 0.0
        %804 = vmatprep.mubr.f32.mxu0 0.0
        %805 = vmatmul.mubr.f32.gmra.mrb[0].mxu0 %v732
        %v806 = vpop.f32.mrb[0].mxu0
        %v807 = vadd.f32 0.0, %v806
        %v808 = vpop.f32.mrb[0].mxu0
        %v809 = vadd.f32 0.0, %v808
        %810 = vdwg.mxu0
        %v811 = vadd.f32 %v717, %v807
        %v812 = vadd.f32 %v718, %v809
        %v813 = vlaneseq
        %v814 = vshrl.u32 %v813, 7
        %v815 = vsub.s32 5, %v814
        %v816 = vrot.slane %v250, %v815
        %v817 = vlaneseq
        %v818 = vshrl.u32 %v817, 7
        %v819 = vsub.s32 5, %v818
        %v820 = vrot.slane %v251, %v819
        %823 = vrot.lane.b32.xlu0 %v816, 1
        %v824 = vpop.permute.xlu0 %823
        %825 = vrot.lane.b32.xlu0 %v820, 1
        %v826 = vpop.permute.xlu0 %825
        %v827 = vsel %vm636, %v824, %v826
        %v831 = vmul.f32 %v254, %v824
        %v832 = vmul.f32 %v256, %v827
        %v833 = vmul.f32 %v826, 0.0
        %s834 = scalar_lea.vmem %s1, 40
        %v835 = vld [vmem:[%s834] sm:$0xff]
        %839 = vrot.lane.b32.xlu0 %v831, 127
        %v840 = vpop.permute.xlu0 %839
        %841 = vrot.lane.b32.xlu0 %v832, 127
        %v842 = vpop.permute.xlu0 %841
        %843 = vrot.lane.b32.xlu0 %v833, 127
        %v844 = vpop.permute.xlu0 %843
        %v845 = vsel %vm617, %v840, %v842
        %v846 = vsel %vm617, %v842, %v844
        %v848 = vsel %vm317, %v835, 0
        %v850 = vsel %vm321, %v845, 0
        %v852 = vsel %vm321, %v846, 0
        %854 = vmatprep.subr.mxu0 %v852
        %855 = vmatpush1.msra.mxu0 %v850
        %856 = vmatprep.subr.mxu0 0.0
        %857 = vmatpush1.msra.mxu0 0.0
        %858 = vmatprep.subr.mxu0 0.0
        %859 = vmatpush1.msra.mxu0 0.0
        %860 = vmatprep.subr.mxu0 0.0
        %861 = vmatpush1.msra.mxu0 0.0
        %862 = vmatprep.subr.mxu0 0.0
        %863 = vmatpush1.msra.mxu0 0.0
        %864 = vmatprep.subr.mxu0 0.0
        %865 = vmatpush1.msra.mxu0 0.0
        %866 = vmatprep.subr.mxu0 0.0
        %867 = vmatpush1.msra.mxu0 0.0
        %868 = vmatprep.subr.mxu0 0.0
        %869 = vmatpush1.msra.mxu0 0.0
        %870 = vmatprep.subr.mxu0 0.0
        %871 = vmatpush1.msra.mxu0 0.0
        %872 = vmatprep.subr.mxu0 0.0
        %873 = vmatpush1.msra.mxu0 0.0
        %874 = vmatprep.subr.mxu0 0.0
        %875 = vmatpush1.msra.mxu0 0.0
        %876 = vmatprep.subr.mxu0 0.0
        %877 = vmatpush1.msra.mxu0 0.0
        %878 = vmatprep.subr.mxu0 0.0
        %879 = vmatpush1.msra.mxu0 0.0
        %880 = vmatprep.subr.mxu0 0.0
        %881 = vmatpush1.msra.mxu0 0.0
        %882 = vmatprep.subr.mxu0 0.0
        %883 = vmatpush1.msra.mxu0 0.0
        %884 = vmatprep.subr.mxu0 0.0
        %885 = vmatpush1.msra.mxu0 0.0
        %886 = vmatprep.subr.mxu0 0.0
        %887 = vmatpush1.msra.mxu0 0.0
        %888 = vmatprep.subr.mxu0 0.0
        %889 = vmatpush1.msra.mxu0 0.0
        %890 = vmatprep.subr.mxu0 0.0
        %891 = vmatpush1.msra.mxu0 0.0
        %892 = vmatprep.subr.mxu0 0.0
        %893 = vmatpush1.msra.mxu0 0.0
        %894 = vmatprep.subr.mxu0 0.0
        %895 = vmatpush1.msra.mxu0 0.0
        %896 = vmatprep.subr.mxu0 0.0
        %897 = vmatpush1.msra.mxu0 0.0
        %898 = vmatprep.subr.mxu0 0.0
        %899 = vmatpush1.msra.mxu0 0.0
        %900 = vmatprep.subr.mxu0 0.0
        %901 = vmatpush1.msra.mxu0 0.0
        %902 = vmatprep.subr.mxu0 0.0
        %903 = vmatpush1.msra.mxu0 0.0
        %904 = vmatprep.subr.mxu0 0.0
        %905 = vmatpush1.msra.mxu0 0.0
        %906 = vmatprep.subr.mxu0 0.0
        %907 = vmatpush1.msra.mxu0 0.0
        %908 = vmatprep.subr.mxu0 0.0
        %909 = vmatpush1.msra.mxu0 0.0
        %910 = vmatprep.subr.mxu0 0.0
        %911 = vmatpush1.msra.mxu0 0.0
        %912 = vmatprep.subr.mxu0 0.0
        %913 = vmatpush1.msra.mxu0 0.0
        %914 = vmatprep.subr.mxu0 0.0
        %915 = vmatpush1.msra.mxu0 0.0
        %916 = vmatprep.subr.mxu0 0.0
        %917 = vmatpush1.msra.mxu0 0.0
        %918 = vmatprep.mubr.f32.mxu0 0.0
        %919 = vmatmul.mubr.f32.gmra.mrb[0].mxu0 %v848
        %v920 = vpop.f32.mrb[0].mxu0
        %v921 = vadd.f32 0.0, %v920
        %v922 = vpop.f32.mrb[0].mxu0
        %v923 = vadd.f32 0.0, %v922
        %924 = vdwg.mxu0
        %v925 = vadd.f32 %v811, %v921
        %v926 = vadd.f32 %v812, %v923
        %v927 = vlaneseq
        %v928 = vshrl.u32 %v927, 7
        %v929 = vsub.s32 6, %v928
        %v930 = vrot.slane %v250, %v929
        %v931 = vlaneseq
        %v932 = vshrl.u32 %v931, 7
        %v933 = vsub.s32 6, %v932
        %v934 = vrot.slane %v251, %v933
        %937 = vrot.lane.b32.xlu0 %v930, 15
        %v938 = vpop.permute.xlu0 %937
        %939 = vrot.lane.b32.xlu0 %v934, 15
        %v940 = vpop.permute.xlu0 %939
        %v941 = vsel %vm520, %v938, %v940
        %v945 = vmul.f32 %v254, %v938
        %v946 = vmul.f32 %v256, %v941
        %v947 = vmul.f32 %v940, 0.0
        %s948 = scalar_lea.vmem %s1, 48
        %v949 = vld [vmem:[%s948] sm:$0xff]
        %953 = vrot.lane.b32.xlu0 %v945, 113
        %v954 = vpop.permute.xlu0 %953
        %955 = vrot.lane.b32.xlu0 %v946, 113
        %v956 = vpop.permute.xlu0 %955
        %957 = vrot.lane.b32.xlu0 %v947, 113
        %v958 = vpop.permute.xlu0 %957
        %v959 = vsel %vm501, %v954, %v956
        %v960 = vsel %vm501, %v956, %v958
        %v962 = vsel %vm317, %v949, 0
        %v964 = vsel %vm321, %v959, 0
        %v966 = vsel %vm321, %v960, 0
        %968 = vmatprep.subr.mxu0 %v966
        %969 = vmatpush1.msra.mxu0 %v964
        %970 = vmatprep.subr.mxu0 0.0
        %971 = vmatpush1.msra.mxu0 0.0
        %972 = vmatprep.subr.mxu0 0.0
        %973 = vmatpush1.msra.mxu0 0.0
        %974 = vmatprep.subr.mxu0 0.0
        %975 = vmatpush1.msra.mxu0 0.0
        %976 = vmatprep.subr.mxu0 0.0
        %977 = vmatpush1.msra.mxu0 0.0
        %978 = vmatprep.subr.mxu0 0.0
        %979 = vmatpush1.msra.mxu0 0.0
        %980 = vmatprep.subr.mxu0 0.0
        %981 = vmatpush1.msra.mxu0 0.0
        %982 = vmatprep.subr.mxu0 0.0
        %983 = vmatpush1.msra.mxu0 0.0
        %984 = vmatprep.subr.mxu0 0.0
        %985 = vmatpush1.msra.mxu0 0.0
        %986 = vmatprep.subr.mxu0 0.0
        %987 = vmatpush1.msra.mxu0 0.0
        %988 = vmatprep.subr.mxu0 0.0
        %989 = vmatpush1.msra.mxu0 0.0
        %990 = vmatprep.subr.mxu0 0.0
        %991 = vmatpush1.msra.mxu0 0.0
        %992 = vmatprep.subr.mxu0 0.0
        %993 = vmatpush1.msra.mxu0 0.0
        %994 = vmatprep.subr.mxu0 0.0
        %995 = vmatpush1.msra.mxu0 0.0
        %996 = vmatprep.subr.mxu0 0.0
        %997 = vmatpush1.msra.mxu0 0.0
        %998 = vmatprep.subr.mxu0 0.0
        %999 = vmatpush1.msra.mxu0 0.0
        %1000 = vmatprep.subr.mxu0 0.0
        %1001 = vmatpush1.msra.mxu0 0.0
        %1002 = vmatprep.subr.mxu0 0.0
        %1003 = vmatpush1.msra.mxu0 0.0
        %1004 = vmatprep.subr.mxu0 0.0
        %1005 = vmatpush1.msra.mxu0 0.0
        %1006 = vmatprep.subr.mxu0 0.0
        %1007 = vmatpush1.msra.mxu0 0.0
        %1008 = vmatprep.subr.mxu0 0.0
        %1009 = vmatpush1.msra.mxu0 0.0
        %1010 = vmatprep.subr.mxu0 0.0
        %1011 = vmatpush1.msra.mxu0 0.0
        %1012 = vmatprep.subr.mxu0 0.0
        %1013 = vmatpush1.msra.mxu0 0.0
        %1014 = vmatprep.subr.mxu0 0.0
        %1015 = vmatpush1.msra.mxu0 0.0
        %1016 = vmatprep.subr.mxu0 0.0
        %1017 = vmatpush1.msra.mxu0 0.0
        %1018 = vmatprep.subr.mxu0 0.0
        %1019 = vmatpush1.msra.mxu0 0.0
        %1020 = vmatprep.subr.mxu0 0.0
        %1021 = vmatpush1.msra.mxu0 0.0
        %1022 = vmatprep.subr.mxu0 0.0
        %1023 = vmatpush1.msra.mxu0 0.0
        %1024 = vmatprep.subr.mxu0 0.0
        %1025 = vmatpush1.msra.mxu0 0.0
        %1026 = vmatprep.subr.mxu0 0.0
        %1027 = vmatpush1.msra.mxu0 0.0
        %1028 = vmatprep.subr.mxu0 0.0
        %1029 = vmatpush1.msra.mxu0 0.0
        %1030 = vmatprep.subr.mxu0 0.0
        %1031 = vmatpush1.msra.mxu0 0.0
        %1032 = vmatprep.mubr.f32.mxu0 0.0
        %1033 = vmatmul.mubr.f32.gmra.mrb[0].mxu0 %v962
        %v1034 = vpop.f32.mrb[0].mxu0
        %v1035 = vadd.f32 0.0, %v1034
        %v1036 = vpop.f32.mrb[0].mxu0
        %v1037 = vadd.f32 0.0, %v1036
        %1038 = vdwg.mxu0
        %v1039 = vadd.f32 %v925, %v1035
        %v1040 = vadd.f32 %v926, %v1037
        %v1041 = vlaneseq
        %v1042 = vshrl.u32 %v1041, 7
        %v1043 = vsub.s32 7, %v1042
        %v1044 = vrot.slane %v250, %v1043
        %v1045 = vlaneseq
        %v1046 = vshrl.u32 %v1045, 7
        %v1047 = vsub.s32 7, %v1046
        %v1048 = vrot.slane %v251, %v1047
        %1051 = vrot.lane.b32.xlu0 %v1044, 16
        %v1052 = vpop.permute.xlu0 %1051
        %1053 = vrot.lane.b32.xlu0 %v1048, 16
        %v1054 = vpop.permute.xlu0 %1053
        %v1055 = vsel %vm314, %v1052, %v1054
        %v1059 = vmul.f32 %v254, %v1052
        %v1060 = vmul.f32 %v256, %v1055
        %v1061 = vmul.f32 %v1054, 0.0
        %s1062 = scalar_lea.vmem %s1, 56
        %v1063 = vld [vmem:[%s1062] sm:$0xff]
        %1067 = vrot.lane.b32.xlu0 %v1059, 112
        %v1068 = vpop.permute.xlu0 %1067
        %1069 = vrot.lane.b32.xlu0 %v1060, 112
        %v1070 = vpop.permute.xlu0 %1069
        %1071 = vrot.lane.b32.xlu0 %v1061, 112
        %v1072 = vpop.permute.xlu0 %1071
        %v1073 = vsel %vm295, %v1068, %v1070
        %v1074 = vsel %vm295, %v1070, %v1072
        %v1076 = vsel %vm317, %v1063, 0
        %v1078 = vsel %vm321, %v1073, 0
        %v1080 = vsel %vm321, %v1074, 0
        %1082 = vmatprep.subr.mxu0 %v1080
        %1083 = vmatpush1.msra.mxu0 %v1078
        %1084 = vmatprep.subr.mxu0 0.0
        %1085 = vmatpush1.msra.mxu0 0.0
        %1086 = vmatprep.subr.mxu0 0.0
        %1087 = vmatpush1.msra.mxu0 0.0
        %1088 = vmatprep.subr.mxu0 0.0
        %1089 = vmatpush1.msra.mxu0 0.0
        %1090 = vmatprep.subr.mxu0 0.0
        %1091 = vmatpush1.msra.mxu0 0.0
        %1092 = vmatprep.subr.mxu0 0.0
        %1093 = vmatpush1.msra.mxu0 0.0
        %1094 = vmatprep.subr.mxu0 0.0
        %1095 = vmatpush1.msra.mxu0 0.0
        %1096 = vmatprep.subr.mxu0 0.0
        %1097 = vmatpush1.msra.mxu0 0.0
        %1098 = vmatprep.subr.mxu0 0.0
        %1099 = vmatpush1.msra.mxu0 0.0
        %1100 = vmatprep.subr.mxu0 0.0
        %1101 = vmatpush1.msra.mxu0 0.0
        %1102 = vmatprep.subr.mxu0 0.0
        %1103 = vmatpush1.msra.mxu0 0.0
        %1104 = vmatprep.subr.mxu0 0.0
        %1105 = vmatpush1.msra.mxu0 0.0
        %1106 = vmatprep.subr.mxu0 0.0
        %1107 = vmatpush1.msra.mxu0 0.0
        %1108 = vmatprep.subr.mxu0 0.0
        %1109 = vmatpush1.msra.mxu0 0.0
        %1110 = vmatprep.subr.mxu0 0.0
        %1111 = vmatpush1.msra.mxu0 0.0
        %1112 = vmatprep.subr.mxu0 0.0
        %1113 = vmatpush1.msra.mxu0 0.0
        %1114 = vmatprep.subr.mxu0 0.0
        %1115 = vmatpush1.msra.mxu0 0.0
        %1116 = vmatprep.subr.mxu0 0.0
        %1117 = vmatpush1.msra.mxu0 0.0
        %1118 = vmatprep.subr.mxu0 0.0
        %1119 = vmatpush1.msra.mxu0 0.0
        %1120 = vmatprep.subr.mxu0 0.0
        %1121 = vmatpush1.msra.mxu0 0.0
        %1122 = vmatprep.subr.mxu0 0.0
        %1123 = vmatpush1.msra.mxu0 0.0
        %1124 = vmatprep.subr.mxu0 0.0
        %1125 = vmatpush1.msra.mxu0 0.0
        %1126 = vmatprep.subr.mxu0 0.0
        %1127 = vmatpush1.msra.mxu0 0.0
        %1128 = vmatprep.subr.mxu0 0.0
        %1129 = vmatpush1.msra.mxu0 0.0
        %1130 = vmatprep.subr.mxu0 0.0
        %1131 = vmatpush1.msra.mxu0 0.0
        %1132 = vmatprep.subr.mxu0 0.0
        %1133 = vmatpush1.msra.mxu0 0.0
        %1134 = vmatprep.subr.mxu0 0.0
        %1135 = vmatpush1.msra.mxu0 0.0
        %1136 = vmatprep.subr.mxu0 0.0
        %1137 = vmatpush1.msra.mxu0 0.0
        %1138 = vmatprep.subr.mxu0 0.0
        %1139 = vmatpush1.msra.mxu0 0.0
        %1140 = vmatprep.subr.mxu0 0.0
        %1141 = vmatpush1.msra.mxu0 0.0
        %1142 = vmatprep.subr.mxu0 0.0
        %1143 = vmatpush1.msra.mxu0 0.0
        %1144 = vmatprep.subr.mxu0 0.0
        %1145 = vmatpush1.msra.mxu0 0.0
        %1146 = vmatprep.mubr.f32.mxu0 0.0
        %1147 = vmatmul.mubr.f32.gmra.mrb[0].mxu0 %v1076
        %v1148 = vpop.f32.mrb[0].mxu0
        %v1149 = vadd.f32 0.0, %v1148
        %v1150 = vpop.f32.mrb[0].mxu0
        %v1151 = vadd.f32 0.0, %v1150
        %1152 = vdwg.mxu0
        %v1153 = vadd.f32 %v1039, %v1149
        %v1154 = vadd.f32 %v1040, %v1151
        %v1155 = vlaneseq
        %v1156 = vshrl.u32 %v1155, 7
        %v1157 = vsub.s32 0, %v1156
        %v1158 = vrot.slane %v252, %v1157
        %v1159 = vlaneseq
        %v1160 = vshrl.u32 %v1159, 7
        %v1161 = vsub.s32 0, %v1160
        %v1162 = vrot.slane %v253, %v1161
        %1165 = vrot.lane.b32.xlu0 %v1158, 17
        %v1166 = vpop.permute.xlu0 %1165
        %1167 = vrot.lane.b32.xlu0 %v1162, 17
        %v1168 = vpop.permute.xlu0 %1167
        %v1169 = vsel %vm406, %v1166, %v1168
        %v1173 = vmul.f32 %v254, %v1166
        %v1174 = vmul.f32 %v256, %v1169
        %v1175 = vmul.f32 %v1168, 0.0
        %s1176 = scalar_lea.vmem %s1, 64
        %v1177 = vld [vmem:[%s1176] sm:$0xff]
        %1181 = vrot.lane.b32.xlu0 %v1173, 111
        %v1182 = vpop.permute.xlu0 %1181
        %1183 = vrot.lane.b32.xlu0 %v1174, 111
        %v1184 = vpop.permute.xlu0 %1183
        %1185 = vrot.lane.b32.xlu0 %v1175, 111
        %v1186 = vpop.permute.xlu0 %1185
        %v1187 = vsel %vm272, %v1182, %v1184
        %v1188 = vsel %vm272, %v1184, %v1186
        %v1190 = vsel %vm317, %v1177, 0
        %v1192 = vsel %vm321, %v1187, 0
        %v1194 = vsel %vm321, %v1188, 0
        %1196 = vmatprep.subr.mxu0 %v1194
        %1197 = vmatpush1.msra.mxu0 %v1192
        %1198 = vmatprep.subr.mxu0 0.0
        %1199 = vmatpush1.msra.mxu0 0.0
        %1200 = vmatprep.subr.mxu0 0.0
        %1201 = vmatpush1.msra.mxu0 0.0
        %1202 = vmatprep.subr.mxu0 0.0
        %1203 = vmatpush1.msra.mxu0 0.0
        %1204 = vmatprep.subr.mxu0 0.0
        %1205 = vmatpush1.msra.mxu0 0.0
        %1206 = vmatprep.subr.mxu0 0.0
        %1207 = vmatpush1.msra.mxu0 0.0
        %1208 = vmatprep.subr.mxu0 0.0
        %1209 = vmatpush1.msra.mxu0 0.0
        %1210 = vmatprep.subr.mxu0 0.0
        %1211 = vmatpush1.msra.mxu0 0.0
        %1212 = vmatprep.subr.mxu0 0.0
        %1213 = vmatpush1.msra.mxu0 0.0
        %1214 = vmatprep.subr.mxu0 0.0
        %1215 = vmatpush1.msra.mxu0 0.0
        %1216 = vmatprep.subr.mxu0 0.0
        %1217 = vmatpush1.msra.mxu0 0.0
        %1218 = vmatprep.subr.mxu0 0.0
        %1219 = vmatpush1.msra.mxu0 0.0
        %1220 = vmatprep.subr.mxu0 0.0
        %1221 = vmatpush1.msra.mxu0 0.0
        %1222 = vmatprep.subr.mxu0 0.0
        %1223 = vmatpush1.msra.mxu0 0.0
        %1224 = vmatprep.subr.mxu0 0.0
        %1225 = vmatpush1.msra.mxu0 0.0
        %1226 = vmatprep.subr.mxu0 0.0
        %1227 = vmatpush1.msra.mxu0 0.0
        %1228 = vmatprep.subr.mxu0 0.0
        %1229 = vmatpush1.msra.mxu0 0.0
        %1230 = vmatprep.subr.mxu0 0.0
        %1231 = vmatpush1.msra.mxu0 0.0
        %1232 = vmatprep.subr.mxu0 0.0
        %1233 = vmatpush1.msra.mxu0 0.0
        %1234 = vmatprep.subr.mxu0 0.0
        %1235 = vmatpush1.msra.mxu0 0.0
        %1236 = vmatprep.subr.mxu0 0.0
        %1237 = vmatpush1.msra.mxu0 0.0
        %1238 = vmatprep.subr.mxu0 0.0
        %1239 = vmatpush1.msra.mxu0 0.0
        %1240 = vmatprep.subr.mxu0 0.0
        %1241 = vmatpush1.msra.mxu0 0.0
        %1242 = vmatprep.subr.mxu0 0.0
        %1243 = vmatpush1.msra.mxu0 0.0
        %1244 = vmatprep.subr.mxu0 0.0
        %1245 = vmatpush1.msra.mxu0 0.0
        %1246 = vmatprep.subr.mxu0 0.0
        %1247 = vmatpush1.msra.mxu0 0.0
        %1248 = vmatprep.subr.mxu0 0.0
        %1249 = vmatpush1.msra.mxu0 0.0
        %1250 = vmatprep.subr.mxu0 0.0
        %1251 = vmatpush1.msra.mxu0 0.0
        %1252 = vmatprep.subr.mxu0 0.0
        %1253 = vmatpush1.msra.mxu0 0.0
        %1254 = vmatprep.subr.mxu0 0.0
        %1255 = vmatpush1.msra.mxu0 0.0
        %1256 = vmatprep.subr.mxu0 0.0
        %1257 = vmatpush1.msra.mxu0 0.0
        %1258 = vmatprep.subr.mxu0 0.0
        %1259 = vmatpush1.msra.mxu0 0.0
        %1260 = vmatprep.mubr.f32.mxu0 0.0
        %1261 = vmatmul.mubr.f32.gmra.mrb[0].mxu0 %v1190
        %v1262 = vpop.f32.mrb[0].mxu0
        %v1263 = vadd.f32 0.0, %v1262
        %v1264 = vpop.f32.mrb[0].mxu0
        %v1265 = vadd.f32 0.0, %v1264
        %1266 = vdwg.mxu0
        %v1267 = vadd.f32 %v1153, %v1263
        %v1268 = vadd.f32 %v1154, %v1265
        %v1269 = vld [vmem:[%s2] sm:$0xff]
        %1271 = vset.pattern.permute.xlu0 0
        %1272 = vperm.xlu0 %1271, %v1269
        %v1273 = vpop.permute.xlu0 %1272
        %v1275 = vadd.f32 %v1267, %v1273
        %v1276 = vadd.f32 %v1268, %v1273
        %v1277 = vadd.f32 %v1275, %v1276
        %1278 = vadd.xlane.f32.xlu0 %v1277
        %v1279 = vpop.xlane.xlu0 %1278
        %v1280 = vmul.f32 %v1275, %v1275
        %v1281 = vmul.f32 %v1276, %v1276
        %v1282 = vadd.f32 %v1280, %v1281
        %1283 = vadd.xlane.f32.xlu0 %v1282
        %v1284 = vpop.xlane.xlu0 %1283
        %v1285 = vmul.f32 %v1279, 0.00390625
        %v1286 = vmul.f32 %v1284, 0.00390625
        %v1287 = vmul.f32 %v1285, %v1285
        %v1288 = vsub.f32 %v1286, %v1287
        %v1289 = vmax.f32 %v1288, 0.0
        %v1290 = vsub.f32 %v1275, %v1285
        %v1291 = vsub.f32 %v1276, %v1285
        %v1292 = vadd.f32 %v1289, 1e-05
        %v1293 = vrsqrt.pop %v1292
        %v1294 = vmul.f32 %v1290, %v1293
        %v1295 = vmul.f32 %v1291, %v1293
        %vm1296 = vcmp.ge.f32.partialorder %v1294, 0.0
        %vm1297 = vcmp.ge.f32.partialorder %v1295, 0.0
        %v1298 = vmul.f32 %v1294, 0.01
        %v1299 = vmul.f32 %v1295, 0.01
        %v1300 = vsel %vm1296, %v1294, %v1298
        %v1301 = vsel %vm1297, %v1295, %v1299
        %v1302 = vmul.f32 %v1300, %v273
        %v1303 = vmul.f32 %v1301, %v271
        %v1304 = vld [vmem:[%s3] sm:$0xf]
        %v1305 = vmul.f32 %v1300, %v296
        %v1306 = vmul.f32 %v1301, %v294
        %s1307 = scalar_lea.vmem %s3, 4
        %v1308 = vld [vmem:[%s1307] sm:$0xf]
        %1311 = vrot.lane.b32.xlu0 %v1305, 16
        %v1312 = vpop.permute.xlu0 %1311
        %1313 = vrot.lane.b32.xlu0 %v1306, 16
        %v1314 = vpop.permute.xlu0 %1313
        %v1315 = vsel %vm314, %v309, %v1312
        %v1316 = vsel %vm314, %v1312, %v1314
        %vm1319 = vcmask 64512
        %v1321 = vsel %vm1319, %v1308, 0
        %1323 = vmatprep.subr.mxu0 %v1316
        %1324 = vmatpush1.msra.mxu0 %v1315
        %1325 = vmatprep.subr.mxu0 0.0
        %1326 = vmatpush1.msra.mxu0 0.0
        %1327 = vmatprep.subr.mxu0 0.0
        %1328 = vmatpush1.msra.mxu0 0.0
        %1329 = vmatprep.subr.mxu0 0.0
        %1330 = vmatpush1.msra.mxu0 0.0
        %1331 = vmatprep.subr.mxu0 0.0
        %1332 = vmatpush1.msra.mxu0 0.0
        %1333 = vmatprep.subr.mxu0 0.0
        %1334 = vmatpush1.msra.mxu0 0.0
        %1335 = vmatprep.subr.mxu0 0.0
        %1336 = vmatpush1.msra.mxu0 0.0
        %1337 = vmatprep.subr.mxu0 0.0
        %1338 = vmatpush1.msra.mxu0 0.0
        %1339 = vmatprep.subr.mxu0 0.0
        %1340 = vmatpush1.msra.mxu0 0.0
        %1341 = vmatprep.subr.mxu0 0.0
        %1342 = vmatpush1.msra.mxu0 0.0
        %1343 = vmatprep.subr.mxu0 0.0
        %1344 = vmatpush1.msra.mxu0 0.0
        %1345 = vmatprep.subr.mxu0 0.0
        %1346 = vmatpush1.msra.mxu0 0.0
        %1347 = vmatprep.subr.mxu0 0.0
        %1348 = vmatpush1.msra.mxu0 0.0
        %1349 = vmatprep.subr.mxu0 0.0
        %1350 = vmatpush1.msra.mxu0 0.0
        %1351 = vmatprep.subr.mxu0 0.0
        %1352 = vmatpush1.msra.mxu0 0.0
        %1353 = vmatprep.subr.mxu0 0.0
        %1354 = vmatpush1.msra.mxu0 0.0
        %1355 = vmatprep.subr.mxu0 0.0
        %1356 = vmatpush1.msra.mxu0 0.0
        %1357 = vmatprep.subr.mxu0 0.0
        %1358 = vmatpush1.msra.mxu0 0.0
        %1359 = vmatprep.subr.mxu0 0.0
        %1360 = vmatpush1.msra.mxu0 0.0
        %1361 = vmatprep.subr.mxu0 0.0
        %1362 = vmatpush1.msra.mxu0 0.0
        %1363 = vmatprep.subr.mxu0 0.0
        %1364 = vmatpush1.msra.mxu0 0.0
        %1365 = vmatprep.subr.mxu0 0.0
        %1366 = vmatpush1.msra.mxu0 0.0
        %1367 = vmatprep.subr.mxu0 0.0
        %1368 = vmatpush1.msra.mxu0 0.0
        %1369 = vmatprep.subr.mxu0 0.0
        %1370 = vmatpush1.msra.mxu0 0.0
        %1371 = vmatprep.subr.mxu0 0.0
        %1372 = vmatpush1.msra.mxu0 0.0
        %1373 = vmatprep.subr.mxu0 0.0
        %1374 = vmatpush1.msra.mxu0 0.0
        %1375 = vmatprep.subr.mxu0 0.0
        %1376 = vmatpush1.msra.mxu0 0.0
        %1377 = vmatprep.subr.mxu0 0.0
        %1378 = vmatpush1.msra.mxu0 0.0
        %1379 = vmatprep.subr.mxu0 0.0
        %1380 = vmatpush1.msra.mxu0 0.0
        %1381 = vmatprep.subr.mxu0 0.0
        %1382 = vmatpush1.msra.mxu0 0.0
        %1383 = vmatprep.subr.mxu0 0.0
        %1384 = vmatpush1.msra.mxu0 0.0
        %1385 = vmatprep.subr.mxu0 0.0
        %1386 = vmatpush1.msra.mxu0 0.0
        %1387 = vmatprep.mubr.f32.mxu0 0.0
        %1388 = vmatmul.mubr.f32.gmra.mrb[0].mxu0 %v1321
        %v1389 = vpop.f32.mrb[0].mxu0
        %v1390 = vadd.f32 0.0, %v1389
        %v1391 = vpop.f32.mrb[0].mxu0
        %v1392 = vadd.f32 0.0, %v1391
        %1393 = vdwg.mxu0
        %1396 = vrot.lane.b32.xlu0 %v1302, 17
        %v1397 = vpop.permute.xlu0 %1396
        %1398 = vrot.lane.b32.xlu0 %v1303, 17
        %v1399 = vpop.permute.xlu0 %1398
        %v1400 = vsel %vm406, %v401, %v1397
        %v1401 = vsel %vm406, %v1397, %v1399
        %v1405 = vsel %vm1319, %v1304, 0
        %1407 = vmatprep.subr.mxu0 %v1401
        %1408 = vmatpush1.msra.mxu0 %v1400
        %1409 = vmatprep.subr.mxu0 0.0
        %1410 = vmatpush1.msra.mxu0 0.0
        %1411 = vmatprep.subr.mxu0 0.0
        %1412 = vmatpush1.msra.mxu0 0.0
        %1413 = vmatprep.subr.mxu0 0.0
        %1414 = vmatpush1.msra.mxu0 0.0
        %1415 = vmatprep.subr.mxu0 0.0
        %1416 = vmatpush1.msra.mxu0 0.0
        %1417 = vmatprep.subr.mxu0 0.0
        %1418 = vmatpush1.msra.mxu0 0.0
        %1419 = vmatprep.subr.mxu0 0.0
        %1420 = vmatpush1.msra.mxu0 0.0
        %1421 = vmatprep.subr.mxu0 0.0
        %1422 = vmatpush1.msra.mxu0 0.0
        %1423 = vmatprep.subr.mxu0 0.0
        %1424 = vmatpush1.msra.mxu0 0.0
        %1425 = vmatprep.subr.mxu0 0.0
        %1426 = vmatpush1.msra.mxu0 0.0
        %1427 = vmatprep.subr.mxu0 0.0
        %1428 = vmatpush1.msra.mxu0 0.0
        %1429 = vmatprep.subr.mxu0 0.0
        %1430 = vmatpush1.msra.mxu0 0.0
        %1431 = vmatprep.subr.mxu0 0.0
        %1432 = vmatpush1.msra.mxu0 0.0
        %1433 = vmatprep.subr.mxu0 0.0
        %1434 = vmatpush1.msra.mxu0 0.0
        %1435 = vmatprep.subr.mxu0 0.0
        %1436 = vmatpush1.msra.mxu0 0.0
        %1437 = vmatprep.subr.mxu0 0.0
        %1438 = vmatpush1.msra.mxu0 0.0
        %1439 = vmatprep.subr.mxu0 0.0
        %1440 = vmatpush1.msra.mxu0 0.0
        %1441 = vmatprep.subr.mxu0 0.0
        %1442 = vmatpush1.msra.mxu0 0.0
        %1443 = vmatprep.subr.mxu0 0.0
        %1444 = vmatpush1.msra.mxu0 0.0
        %1445 = vmatprep.subr.mxu0 0.0
        %1446 = vmatpush1.msra.mxu0 0.0
        %1447 = vmatprep.subr.mxu0 0.0
        %1448 = vmatpush1.msra.mxu0 0.0
        %1449 = vmatprep.subr.mxu0 0.0
        %1450 = vmatpush1.msra.mxu0 0.0
        %1451 = vmatprep.subr.mxu0 0.0
        %1452 = vmatpush1.msra.mxu0 0.0
        %1453 = vmatprep.subr.mxu0 0.0
        %1454 = vmatpush1.msra.mxu0 0.0
        %1455 = vmatprep.subr.mxu0 0.0
        %1456 = vmatpush1.msra.mxu0 0.0
        %1457 = vmatprep.subr.mxu0 0.0
        %1458 = vmatpush1.msra.mxu0 0.0
        %1459 = vmatprep.subr.mxu0 0.0
        %1460 = vmatpush1.msra.mxu0 0.0
        %1461 = vmatprep.subr.mxu0 0.0
        %1462 = vmatpush1.msra.mxu0 0.0
        %1463 = vmatprep.subr.mxu0 0.0
        %1464 = vmatpush1.msra.mxu0 0.0
        %1465 = vmatprep.subr.mxu0 0.0
        %1466 = vmatpush1.msra.mxu0 0.0
        %1467 = vmatprep.subr.mxu0 0.0
        %1468 = vmatpush1.msra.mxu0 0.0
        %1469 = vmatprep.subr.mxu0 0.0
        %1470 = vmatpush1.msra.mxu0 0.0
        %1471 = vmatprep.mubr.f32.mxu0 0.0
        %1472 = vmatmul.mubr.f32.gmra.mrb[0].mxu0 %v1405
        %v1473 = vpop.f32.mrb[0].mxu0
        %v1474 = vadd.f32 %v1390, %v1473
        %v1475 = vpop.f32.mrb[0].mxu0
        %v1476 = vadd.f32 %v1392, %v1475
        %1477 = vdwg.mxu0
        %v1478 = vmul.f32 %v1300, %v502
        %v1479 = vmul.f32 %v1301, %v500
        %s1480 = scalar_lea.vmem %s3, 8
        %v1481 = vld [vmem:[%s1480] sm:$0xf]
        %1484 = vrot.lane.b32.xlu0 %v1478, 15
        %v1485 = vpop.permute.xlu0 %1484
        %1486 = vrot.lane.b32.xlu0 %v1479, 15
        %v1487 = vpop.permute.xlu0 %1486
        %v1488 = vsel %vm520, %v515, %v1485
        %v1489 = vsel %vm520, %v1485, %v1487
        %v1493 = vsel %vm1319, %v1481, 0
        %1495 = vmatprep.subr.mxu0 %v1489
        %1496 = vmatpush1.msra.mxu0 %v1488
        %1497 = vmatprep.subr.mxu0 0.0
        %1498 = vmatpush1.msra.mxu0 0.0
        %1499 = vmatprep.subr.mxu0 0.0
        %1500 = vmatpush1.msra.mxu0 0.0
        %1501 = vmatprep.subr.mxu0 0.0
        %1502 = vmatpush1.msra.mxu0 0.0
        %1503 = vmatprep.subr.mxu0 0.0
        %1504 = vmatpush1.msra.mxu0 0.0
        %1505 = vmatprep.subr.mxu0 0.0
        %1506 = vmatpush1.msra.mxu0 0.0
        %1507 = vmatprep.subr.mxu0 0.0
        %1508 = vmatpush1.msra.mxu0 0.0
        %1509 = vmatprep.subr.mxu0 0.0
        %1510 = vmatpush1.msra.mxu0 0.0
        %1511 = vmatprep.subr.mxu0 0.0
        %1512 = vmatpush1.msra.mxu0 0.0
        %1513 = vmatprep.subr.mxu0 0.0
        %1514 = vmatpush1.msra.mxu0 0.0
        %1515 = vmatprep.subr.mxu0 0.0
        %1516 = vmatpush1.msra.mxu0 0.0
        %1517 = vmatprep.subr.mxu0 0.0
        %1518 = vmatpush1.msra.mxu0 0.0
        %1519 = vmatprep.subr.mxu0 0.0
        %1520 = vmatpush1.msra.mxu0 0.0
        %1521 = vmatprep.subr.mxu0 0.0
        %1522 = vmatpush1.msra.mxu0 0.0
        %1523 = vmatprep.subr.mxu0 0.0
        %1524 = vmatpush1.msra.mxu0 0.0
        %1525 = vmatprep.subr.mxu0 0.0
        %1526 = vmatpush1.msra.mxu0 0.0
        %1527 = vmatprep.subr.mxu0 0.0
        %1528 = vmatpush1.msra.mxu0 0.0
        %1529 = vmatprep.subr.mxu0 0.0
        %1530 = vmatpush1.msra.mxu0 0.0
        %1531 = vmatprep.subr.mxu0 0.0
        %1532 = vmatpush1.msra.mxu0 0.0
        %1533 = vmatprep.subr.mxu0 0.0
        %1534 = vmatpush1.msra.mxu0 0.0
        %1535 = vmatprep.subr.mxu0 0.0
        %1536 = vmatpush1.msra.mxu0 0.0
        %1537 = vmatprep.subr.mxu0 0.0
        %1538 = vmatpush1.msra.mxu0 0.0
        %1539 = vmatprep.subr.mxu0 0.0
        %1540 = vmatpush1.msra.mxu0 0.0
        %1541 = vmatprep.subr.mxu0 0.0
        %1542 = vmatpush1.msra.mxu0 0.0
        %1543 = vmatprep.subr.mxu0 0.0
        %1544 = vmatpush1.msra.mxu0 0.0
        %1545 = vmatprep.subr.mxu0 0.0
        %1546 = vmatpush1.msra.mxu0 0.0
        %1547 = vmatprep.subr.mxu0 0.0
        %1548 = vmatpush1.msra.mxu0 0.0
        %1549 = vmatprep.subr.mxu0 0.0
        %1550 = vmatpush1.msra.mxu0 0.0
        %1551 = vmatprep.subr.mxu0 0.0
        %1552 = vmatpush1.msra.mxu0 0.0
        %1553 = vmatprep.subr.mxu0 0.0
        %1554 = vmatpush1.msra.mxu0 0.0
        %1555 = vmatprep.subr.mxu0 0.0
        %1556 = vmatpush1.msra.mxu0 0.0
        %1557 = vmatprep.subr.mxu0 0.0
        %1558 = vmatpush1.msra.mxu0 0.0
        %1559 = vmatprep.mubr.f32.mxu0 0.0
        %1560 = vmatmul.mubr.f32.gmra.mrb[0].mxu0 %v1493
        %v1561 = vpop.f32.mrb[0].mxu0
        %v1562 = vadd.f32 0.0, %v1561
        %v1563 = vpop.f32.mrb[0].mxu0
        %v1564 = vadd.f32 0.0, %v1563
        %1565 = vdwg.mxu0
        %v1566 = vadd.f32 %v1474, %v1562
        %v1567 = vadd.f32 %v1476, %v1564
        %v1568 = vmul.f32 %v1300, %v618
        %v1569 = vmul.f32 %v1301, %v616
        %s1570 = scalar_lea.vmem %s3, 12
        %v1571 = vld [vmem:[%s1570] sm:$0xf]
        %1574 = vrot.lane.b32.xlu0 %v1568, 1
        %v1575 = vpop.permute.xlu0 %1574
        %1576 = vrot.lane.b32.xlu0 %v1569, 1
        %v1577 = vpop.permute.xlu0 %1576
        %v1578 = vsel %vm636, %v631, %v1575
        %v1579 = vsel %vm636, %v1575, %v1577
        %v1583 = vsel %vm1319, %v1571, 0
        %1585 = vmatprep.subr.mxu0 %v1579
        %1586 = vmatpush1.msra.mxu0 %v1578
        %1587 = vmatprep.subr.mxu0 0.0
        %1588 = vmatpush1.msra.mxu0 0.0
        %1589 = vmatprep.subr.mxu0 0.0
        %1590 = vmatpush1.msra.mxu0 0.0
        %1591 = vmatprep.subr.mxu0 0.0
        %1592 = vmatpush1.msra.mxu0 0.0
        %1593 = vmatprep.subr.mxu0 0.0
        %1594 = vmatpush1.msra.mxu0 0.0
        %1595 = vmatprep.subr.mxu0 0.0
        %1596 = vmatpush1.msra.mxu0 0.0
        %1597 = vmatprep.subr.mxu0 0.0
        %1598 = vmatpush1.msra.mxu0 0.0
        %1599 = vmatprep.subr.mxu0 0.0
        %1600 = vmatpush1.msra.mxu0 0.0
        %1601 = vmatprep.subr.mxu0 0.0
        %1602 = vmatpush1.msra.mxu0 0.0
        %1603 = vmatprep.subr.mxu0 0.0
        %1604 = vmatpush1.msra.mxu0 0.0
        %1605 = vmatprep.subr.mxu0 0.0
        %1606 = vmatpush1.msra.mxu0 0.0
        %1607 = vmatprep.subr.mxu0 0.0
        %1608 = vmatpush1.msra.mxu0 0.0
        %1609 = vmatprep.subr.mxu0 0.0
        %1610 = vmatpush1.msra.mxu0 0.0
        %1611 = vmatprep.subr.mxu0 0.0
        %1612 = vmatpush1.msra.mxu0 0.0
        %1613 = vmatprep.subr.mxu0 0.0
        %1614 = vmatpush1.msra.mxu0 0.0
        %1615 = vmatprep.subr.mxu0 0.0
        %1616 = vmatpush1.msra.mxu0 0.0
        %1617 = vmatprep.subr.mxu0 0.0
        %1618 = vmatpush1.msra.mxu0 0.0
        %1619 = vmatprep.subr.mxu0 0.0
        %1620 = vmatpush1.msra.mxu0 0.0
        %1621 = vmatprep.subr.mxu0 0.0
        %1622 = vmatpush1.msra.mxu0 0.0
        %1623 = vmatprep.subr.mxu0 0.0
        %1624 = vmatpush1.msra.mxu0 0.0
        %1625 = vmatprep.subr.mxu0 0.0
        %1626 = vmatpush1.msra.mxu0 0.0
        %1627 = vmatprep.subr.mxu0 0.0
        %1628 = vmatpush1.msra.mxu0 0.0
        %1629 = vmatprep.subr.mxu0 0.0
        %1630 = vmatpush1.msra.mxu0 0.0
        %1631 = vmatprep.subr.mxu0 0.0
        %1632 = vmatpush1.msra.mxu0 0.0
        %1633 = vmatprep.subr.mxu0 0.0
        %1634 = vmatpush1.msra.mxu0 0.0
        %1635 = vmatprep.subr.mxu0 0.0
        %1636 = vmatpush1.msra.mxu0 0.0
        %1637 = vmatprep.subr.mxu0 0.0
        %1638 = vmatpush1.msra.mxu0 0.0
        %1639 = vmatprep.subr.mxu0 0.0
        %1640 = vmatpush1.msra.mxu0 0.0
        %1641 = vmatprep.subr.mxu0 0.0
        %1642 = vmatpush1.msra.mxu0 0.0
        %1643 = vmatprep.subr.mxu0 0.0
        %1644 = vmatpush1.msra.mxu0 0.0
        %1645 = vmatprep.subr.mxu0 0.0
        %1646 = vmatpush1.msra.mxu0 0.0
        %1647 = vmatprep.subr.mxu0 0.0
        %1648 = vmatpush1.msra.mxu0 0.0
        %1649 = vmatprep.mubr.f32.mxu0 0.0
        %1650 = vmatmul.mubr.f32.gmra.mrb[0].mxu0 %v1583
        %v1651 = vpop.f32.mrb[0].mxu0
        %v1652 = vadd.f32 0.0, %v1651
        %v1653 = vpop.f32.mrb[0].mxu0
        %v1654 = vadd.f32 0.0, %v1653
        %1655 = vdwg.mxu0
        %v1656 = vadd.f32 %v1566, %v1652
        %v1657 = vadd.f32 %v1567, %v1654
        %v1658 = vmul.f32 %v1300, %v722
        %v1659 = vmul.f32 %v1301, %v726
        %s1660 = scalar_lea.vmem %s3, 16
        %v1661 = vld [vmem:[%s1660] sm:$0xf]
        %v1663 = vsel %vm1319, %v1661, 0
        %1665 = vmatprep.subr.mxu0 %v1659
        %1666 = vmatpush1.msra.mxu0 %v1658
        %1667 = vmatprep.subr.mxu0 0.0
        %1668 = vmatpush1.msra.mxu0 0.0
        %1669 = vmatprep.subr.mxu0 0.0
        %1670 = vmatpush1.msra.mxu0 0.0
        %1671 = vmatprep.subr.mxu0 0.0
        %1672 = vmatpush1.msra.mxu0 0.0
        %1673 = vmatprep.subr.mxu0 0.0
        %1674 = vmatpush1.msra.mxu0 0.0
        %1675 = vmatprep.subr.mxu0 0.0
        %1676 = vmatpush1.msra.mxu0 0.0
        %1677 = vmatprep.subr.mxu0 0.0
        %1678 = vmatpush1.msra.mxu0 0.0
        %1679 = vmatprep.subr.mxu0 0.0
        %1680 = vmatpush1.msra.mxu0 0.0
        %1681 = vmatprep.subr.mxu0 0.0
        %1682 = vmatpush1.msra.mxu0 0.0
        %1683 = vmatprep.subr.mxu0 0.0
        %1684 = vmatpush1.msra.mxu0 0.0
        %1685 = vmatprep.subr.mxu0 0.0
        %1686 = vmatpush1.msra.mxu0 0.0
        %1687 = vmatprep.subr.mxu0 0.0
        %1688 = vmatpush1.msra.mxu0 0.0
        %1689 = vmatprep.subr.mxu0 0.0
        %1690 = vmatpush1.msra.mxu0 0.0
        %1691 = vmatprep.subr.mxu0 0.0
        %1692 = vmatpush1.msra.mxu0 0.0
        %1693 = vmatprep.subr.mxu0 0.0
        %1694 = vmatpush1.msra.mxu0 0.0
        %1695 = vmatprep.subr.mxu0 0.0
        %1696 = vmatpush1.msra.mxu0 0.0
        %1697 = vmatprep.subr.mxu0 0.0
        %1698 = vmatpush1.msra.mxu0 0.0
        %1699 = vmatprep.subr.mxu0 0.0
        %1700 = vmatpush1.msra.mxu0 0.0
        %1701 = vmatprep.subr.mxu0 0.0
        %1702 = vmatpush1.msra.mxu0 0.0
        %1703 = vmatprep.subr.mxu0 0.0
        %1704 = vmatpush1.msra.mxu0 0.0
        %1705 = vmatprep.subr.mxu0 0.0
        %1706 = vmatpush1.msra.mxu0 0.0
        %1707 = vmatprep.subr.mxu0 0.0
        %1708 = vmatpush1.msra.mxu0 0.0
        %1709 = vmatprep.subr.mxu0 0.0
        %1710 = vmatpush1.msra.mxu0 0.0
        %1711 = vmatprep.subr.mxu0 0.0
        %1712 = vmatpush1.msra.mxu0 0.0
        %1713 = vmatprep.subr.mxu0 0.0
        %1714 = vmatpush1.msra.mxu0 0.0
        %1715 = vmatprep.subr.mxu0 0.0
        %1716 = vmatpush1.msra.mxu0 0.0
        %1717 = vmatprep.subr.mxu0 0.0
        %1718 = vmatpush1.msra.mxu0 0.0
        %1719 = vmatprep.subr.mxu0 0.0
        %1720 = vmatpush1.msra.mxu0 0.0
        %1721 = vmatprep.subr.mxu0 0.0
        %1722 = vmatpush1.msra.mxu0 0.0
        %1723 = vmatprep.subr.mxu0 0.0
        %1724 = vmatpush1.msra.mxu0 0.0
        %1725 = vmatprep.subr.mxu0 0.0
        %1726 = vmatpush1.msra.mxu0 0.0
        %1727 = vmatprep.subr.mxu0 0.0
        %1728 = vmatpush1.msra.mxu0 0.0
        %1729 = vmatprep.mubr.f32.mxu0 0.0
        %1730 = vmatmul.mubr.f32.gmra.mrb[0].mxu0 %v1663
        %v1731 = vpop.f32.mrb[0].mxu0
        %v1732 = vadd.f32 0.0, %v1731
        %v1733 = vpop.f32.mrb[0].mxu0
        %v1734 = vadd.f32 0.0, %v1733
        %1735 = vdwg.mxu0
        %v1736 = vadd.f32 %v1656, %v1732
        %v1737 = vadd.f32 %v1657, %v1734
        %v1738 = vmul.f32 %v1300, %v824
        %v1739 = vmul.f32 %v1301, %v827
        %s1740 = scalar_lea.vmem %s3, 20
        %v1741 = vld [vmem:[%s1740] sm:$0xf]
        %1744 = vrot.lane.b32.xlu0 %v1738, 127
        %v1745 = vpop.permute.xlu0 %1744
        %1746 = vrot.lane.b32.xlu0 %v1739, 127
        %v1747 = vpop.permute.xlu0 %1746
        %v1748 = vsel %vm617, %v1745, %v1747
        %v1749 = vsel %vm617, %v1747, %v844
        %v1753 = vsel %vm1319, %v1741, 0
        %1755 = vmatprep.subr.mxu0 %v1749
        %1756 = vmatpush1.msra.mxu0 %v1748
        %1757 = vmatprep.subr.mxu0 0.0
        %1758 = vmatpush1.msra.mxu0 0.0
        %1759 = vmatprep.subr.mxu0 0.0
        %1760 = vmatpush1.msra.mxu0 0.0
        %1761 = vmatprep.subr.mxu0 0.0
        %1762 = vmatpush1.msra.mxu0 0.0
        %1763 = vmatprep.subr.mxu0 0.0
        %1764 = vmatpush1.msra.mxu0 0.0
        %1765 = vmatprep.subr.mxu0 0.0
        %1766 = vmatpush1.msra.mxu0 0.0
        %1767 = vmatprep.subr.mxu0 0.0
        %1768 = vmatpush1.msra.mxu0 0.0
        %1769 = vmatprep.subr.mxu0 0.0
        %1770 = vmatpush1.msra.mxu0 0.0
        %1771 = vmatprep.subr.mxu0 0.0
        %1772 = vmatpush1.msra.mxu0 0.0
        %1773 = vmatprep.subr.mxu0 0.0
        %1774 = vmatpush1.msra.mxu0 0.0
        %1775 = vmatprep.subr.mxu0 0.0
        %1776 = vmatpush1.msra.mxu0 0.0
        %1777 = vmatprep.subr.mxu0 0.0
        %1778 = vmatpush1.msra.mxu0 0.0
        %1779 = vmatprep.subr.mxu0 0.0
        %1780 = vmatpush1.msra.mxu0 0.0
        %1781 = vmatprep.subr.mxu0 0.0
        %1782 = vmatpush1.msra.mxu0 0.0
        %1783 = vmatprep.subr.mxu0 0.0
        %1784 = vmatpush1.msra.mxu0 0.0
        %1785 = vmatprep.subr.mxu0 0.0
        %1786 = vmatpush1.msra.mxu0 0.0
        %1787 = vmatprep.subr.mxu0 0.0
        %1788 = vmatpush1.msra.mxu0 0.0
        %1789 = vmatprep.subr.mxu0 0.0
        %1790 = vmatpush1.msra.mxu0 0.0
        %1791 = vmatprep.subr.mxu0 0.0
        %1792 = vmatpush1.msra.mxu0 0.0
        %1793 = vmatprep.subr.mxu0 0.0
        %1794 = vmatpush1.msra.mxu0 0.0
        %1795 = vmatprep.subr.mxu0 0.0
        %1796 = vmatpush1.msra.mxu0 0.0
        %1797 = vmatprep.subr.mxu0 0.0
        %1798 = vmatpush1.msra.mxu0 0.0
        %1799 = vmatprep.subr.mxu0 0.0
        %1800 = vmatpush1.msra.mxu0 0.0
        %1801 = vmatprep.subr.mxu0 0.0
        %1802 = vmatpush1.msra.mxu0 0.0
        %1803 = vmatprep.subr.mxu0 0.0
        %1804 = vmatpush1.msra.mxu0 0.0
        %1805 = vmatprep.subr.mxu0 0.0
        %1806 = vmatpush1.msra.mxu0 0.0
        %1807 = vmatprep.subr.mxu0 0.0
        %1808 = vmatpush1.msra.mxu0 0.0
        %1809 = vmatprep.subr.mxu0 0.0
        %1810 = vmatpush1.msra.mxu0 0.0
        %1811 = vmatprep.subr.mxu0 0.0
        %1812 = vmatpush1.msra.mxu0 0.0
        %1813 = vmatprep.subr.mxu0 0.0
        %1814 = vmatpush1.msra.mxu0 0.0
        %1815 = vmatprep.subr.mxu0 0.0
        %1816 = vmatpush1.msra.mxu0 0.0
        %1817 = vmatprep.subr.mxu0 0.0
        %1818 = vmatpush1.msra.mxu0 0.0
        %1819 = vmatprep.mubr.f32.mxu0 0.0
        %1820 = vmatmul.mubr.f32.gmra.mrb[0].mxu0 %v1753
        %v1821 = vpop.f32.mrb[0].mxu0
        %v1822 = vadd.f32 0.0, %v1821
        %v1823 = vpop.f32.mrb[0].mxu0
        %v1824 = vadd.f32 0.0, %v1823
        %1825 = vdwg.mxu0
        %v1826 = vadd.f32 %v1736, %v1822
        %v1827 = vadd.f32 %v1737, %v1824
        %v1828 = vmul.f32 %v1300, %v938
        %v1829 = vmul.f32 %v1301, %v941
        %s1830 = scalar_lea.vmem %s3, 24
        %v1831 = vld [vmem:[%s1830] sm:$0xf]
        %1834 = vrot.lane.b32.xlu0 %v1828, 113
        %v1835 = vpop.permute.xlu0 %1834
        %1836 = vrot.lane.b32.xlu0 %v1829, 113
        %v1837 = vpop.permute.xlu0 %1836
        %v1838 = vsel %vm501, %v1835, %v1837
        %v1839 = vsel %vm501, %v1837, %v958
        %v1843 = vsel %vm1319, %v1831, 0
        %1845 = vmatprep.subr.mxu0 %v1839
        %1846 = vmatpush1.msra.mxu0 %v1838
        %1847 = vmatprep.subr.mxu0 0.0
        %1848 = vmatpush1.msra.mxu0 0.0
        %1849 = vmatprep.subr.mxu0 0.0
        %1850 = vmatpush1.msra.mxu0 0.0
        %1851 = vmatprep.subr.mxu0 0.0
        %1852 = vmatpush1.msra.mxu0 0.0
        %1853 = vmatprep.subr.mxu0 0.0
        %1854 = vmatpush1.msra.mxu0 0.0
        %1855 = vmatprep.subr.mxu0 0.0
        %1856 = vmatpush1.msra.mxu0 0.0
        %1857 = vmatprep.subr.mxu0 0.0
        %1858 = vmatpush1.msra.mxu0 0.0
        %1859 = vmatprep.subr.mxu0 0.0
        %1860 = vmatpush1.msra.mxu0 0.0
        %1861 = vmatprep.subr.mxu0 0.0
        %1862 = vmatpush1.msra.mxu0 0.0
        %1863 = vmatprep.subr.mxu0 0.0
        %1864 = vmatpush1.msra.mxu0 0.0
        %1865 = vmatprep.subr.mxu0 0.0
        %1866 = vmatpush1.msra.mxu0 0.0
        %1867 = vmatprep.subr.mxu0 0.0
        %1868 = vmatpush1.msra.mxu0 0.0
        %1869 = vmatprep.subr.mxu0 0.0
        %1870 = vmatpush1.msra.mxu0 0.0
        %1871 = vmatprep.subr.mxu0 0.0
        %1872 = vmatpush1.msra.mxu0 0.0
        %1873 = vmatprep.subr.mxu0 0.0
        %1874 = vmatpush1.msra.mxu0 0.0
        %1875 = vmatprep.subr.mxu0 0.0
        %1876 = vmatpush1.msra.mxu0 0.0
        %1877 = vmatprep.subr.mxu0 0.0
        %1878 = vmatpush1.msra.mxu0 0.0
        %1879 = vmatprep.subr.mxu0 0.0
        %1880 = vmatpush1.msra.mxu0 0.0
        %1881 = vmatprep.subr.mxu0 0.0
        %1882 = vmatpush1.msra.mxu0 0.0
        %1883 = vmatprep.subr.mxu0 0.0
        %1884 = vmatpush1.msra.mxu0 0.0
        %1885 = vmatprep.subr.mxu0 0.0
        %1886 = vmatpush1.msra.mxu0 0.0
        %1887 = vmatprep.subr.mxu0 0.0
        %1888 = vmatpush1.msra.mxu0 0.0
        %1889 = vmatprep.subr.mxu0 0.0
        %1890 = vmatpush1.msra.mxu0 0.0
        %1891 = vmatprep.subr.mxu0 0.0
        %1892 = vmatpush1.msra.mxu0 0.0
        %1893 = vmatprep.subr.mxu0 0.0
        %1894 = vmatpush1.msra.mxu0 0.0
        %1895 = vmatprep.subr.mxu0 0.0
        %1896 = vmatpush1.msra.mxu0 0.0
        %1897 = vmatprep.subr.mxu0 0.0
        %1898 = vmatpush1.msra.mxu0 0.0
        %1899 = vmatprep.subr.mxu0 0.0
        %1900 = vmatpush1.msra.mxu0 0.0
        %1901 = vmatprep.subr.mxu0 0.0
        %1902 = vmatpush1.msra.mxu0 0.0
        %1903 = vmatprep.subr.mxu0 0.0
        %1904 = vmatpush1.msra.mxu0 0.0
        %1905 = vmatprep.subr.mxu0 0.0
        %1906 = vmatpush1.msra.mxu0 0.0
        %1907 = vmatprep.subr.mxu0 0.0
        %1908 = vmatpush1.msra.mxu0 0.0
        %1909 = vmatprep.mubr.f32.mxu0 0.0
        %1910 = vmatmul.mubr.f32.gmra.mrb[0].mxu0 %v1843
        %v1911 = vpop.f32.mrb[0].mxu0
        %v1912 = vadd.f32 0.0, %v1911
        %v1913 = vpop.f32.mrb[0].mxu0
        %v1914 = vadd.f32 0.0, %v1913
        %1915 = vdwg.mxu0
        %v1916 = vadd.f32 %v1826, %v1912
        %v1917 = vadd.f32 %v1827, %v1914
        %v1918 = vmul.f32 %v1300, %v1052
        %v1919 = vmul.f32 %v1301, %v1055
        %s1920 = scalar_lea.vmem %s3, 28
        %v1921 = vld [vmem:[%s1920] sm:$0xf]
        %1924 = vrot.lane.b32.xlu0 %v1918, 112
        %v1925 = vpop.permute.xlu0 %1924
        %1926 = vrot.lane.b32.xlu0 %v1919, 112
        %v1927 = vpop.permute.xlu0 %1926
        %v1928 = vsel %vm295, %v1925, %v1927
        %v1929 = vsel %vm295, %v1927, %v1072
        %v1933 = vsel %vm1319, %v1921, 0
        %1935 = vmatprep.subr.mxu0 %v1929
        %1936 = vmatpush1.msra.mxu0 %v1928
        %1937 = vmatprep.subr.mxu0 0.0
        %1938 = vmatpush1.msra.mxu0 0.0
        %1939 = vmatprep.subr.mxu0 0.0
        %1940 = vmatpush1.msra.mxu0 0.0
        %1941 = vmatprep.subr.mxu0 0.0
        %1942 = vmatpush1.msra.mxu0 0.0
        %1943 = vmatprep.subr.mxu0 0.0
        %1944 = vmatpush1.msra.mxu0 0.0
        %1945 = vmatprep.subr.mxu0 0.0
        %1946 = vmatpush1.msra.mxu0 0.0
        %1947 = vmatprep.subr.mxu0 0.0
        %1948 = vmatpush1.msra.mxu0 0.0
        %1949 = vmatprep.subr.mxu0 0.0
        %1950 = vmatpush1.msra.mxu0 0.0
        %1951 = vmatprep.subr.mxu0 0.0
        %1952 = vmatpush1.msra.mxu0 0.0
        %1953 = vmatprep.subr.mxu0 0.0
        %1954 = vmatpush1.msra.mxu0 0.0
        %1955 = vmatprep.subr.mxu0 0.0
        %1956 = vmatpush1.msra.mxu0 0.0
        %1957 = vmatprep.subr.mxu0 0.0
        %1958 = vmatpush1.msra.mxu0 0.0
        %1959 = vmatprep.subr.mxu0 0.0
        %1960 = vmatpush1.msra.mxu0 0.0
        %1961 = vmatprep.subr.mxu0 0.0
        %1962 = vmatpush1.msra.mxu0 0.0
        %1963 = vmatprep.subr.mxu0 0.0
        %1964 = vmatpush1.msra.mxu0 0.0
        %1965 = vmatprep.subr.mxu0 0.0
        %1966 = vmatpush1.msra.mxu0 0.0
        %1967 = vmatprep.subr.mxu0 0.0
        %1968 = vmatpush1.msra.mxu0 0.0
        %1969 = vmatprep.subr.mxu0 0.0
        %1970 = vmatpush1.msra.mxu0 0.0
        %1971 = vmatprep.subr.mxu0 0.0
        %1972 = vmatpush1.msra.mxu0 0.0
        %1973 = vmatprep.subr.mxu0 0.0
        %1974 = vmatpush1.msra.mxu0 0.0
        %1975 = vmatprep.subr.mxu0 0.0
        %1976 = vmatpush1.msra.mxu0 0.0
        %1977 = vmatprep.subr.mxu0 0.0
        %1978 = vmatpush1.msra.mxu0 0.0
        %1979 = vmatprep.subr.mxu0 0.0
        %1980 = vmatpush1.msra.mxu0 0.0
        %1981 = vmatprep.subr.mxu0 0.0
        %1982 = vmatpush1.msra.mxu0 0.0
        %1983 = vmatprep.subr.mxu0 0.0
        %1984 = vmatpush1.msra.mxu0 0.0
        %1985 = vmatprep.subr.mxu0 0.0
        %1986 = vmatpush1.msra.mxu0 0.0
        %1987 = vmatprep.subr.mxu0 0.0
        %1988 = vmatpush1.msra.mxu0 0.0
        %1989 = vmatprep.subr.mxu0 0.0
        %1990 = vmatpush1.msra.mxu0 0.0
        %1991 = vmatprep.subr.mxu0 0.0
        %1992 = vmatpush1.msra.mxu0 0.0
        %1993 = vmatprep.subr.mxu0 0.0
        %1994 = vmatpush1.msra.mxu0 0.0
        %1995 = vmatprep.subr.mxu0 0.0
        %1996 = vmatpush1.msra.mxu0 0.0
        %1997 = vmatprep.subr.mxu0 0.0
        %1998 = vmatpush1.msra.mxu0 0.0
        %1999 = vmatprep.mubr.f32.mxu0 0.0
        %2000 = vmatmul.mubr.f32.gmra.mrb[0].mxu0 %v1933
        %v2001 = vpop.f32.mrb[0].mxu0
        %v2002 = vadd.f32 0.0, %v2001
        %v2003 = vpop.f32.mrb[0].mxu0
        %v2004 = vadd.f32 0.0, %v2003
        %2005 = vdwg.mxu0
        %v2006 = vadd.f32 %v1916, %v2002
        %v2007 = vadd.f32 %v1917, %v2004
        %v2008 = vmul.f32 %v1300, %v1166
        %v2009 = vmul.f32 %v1301, %v1169
        %s2010 = scalar_lea.vmem %s3, 32
        %v2011 = vld [vmem:[%s2010] sm:$0xf]
        %2014 = vrot.lane.b32.xlu0 %v2008, 111
        %v2015 = vpop.permute.xlu0 %2014
        %2016 = vrot.lane.b32.xlu0 %v2009, 111
        %v2017 = vpop.permute.xlu0 %2016
        %v2018 = vsel %vm272, %v2015, %v2017
        %v2019 = vsel %vm272, %v2017, %v1186
        %v2023 = vsel %vm1319, %v2011, 0
        %2025 = vmatprep.subr.mxu0 %v2019
        %2026 = vmatpush1.msra.mxu0 %v2018
        %2027 = vmatprep.subr.mxu0 0.0
        %2028 = vmatpush1.msra.mxu0 0.0
        %2029 = vmatprep.subr.mxu0 0.0
        %2030 = vmatpush1.msra.mxu0 0.0
        %2031 = vmatprep.subr.mxu0 0.0
        %2032 = vmatpush1.msra.mxu0 0.0
        %2033 = vmatprep.subr.mxu0 0.0
        %2034 = vmatpush1.msra.mxu0 0.0
        %2035 = vmatprep.subr.mxu0 0.0
        %2036 = vmatpush1.msra.mxu0 0.0
        %2037 = vmatprep.subr.mxu0 0.0
        %2038 = vmatpush1.msra.mxu0 0.0
        %2039 = vmatprep.subr.mxu0 0.0
        %2040 = vmatpush1.msra.mxu0 0.0
        %2041 = vmatprep.subr.mxu0 0.0
        %2042 = vmatpush1.msra.mxu0 0.0
        %2043 = vmatprep.subr.mxu0 0.0
        %2044 = vmatpush1.msra.mxu0 0.0
        %2045 = vmatprep.subr.mxu0 0.0
        %2046 = vmatpush1.msra.mxu0 0.0
        %2047 = vmatprep.subr.mxu0 0.0
        %2048 = vmatpush1.msra.mxu0 0.0
        %2049 = vmatprep.subr.mxu0 0.0
        %2050 = vmatpush1.msra.mxu0 0.0
        %2051 = vmatprep.subr.mxu0 0.0
        %2052 = vmatpush1.msra.mxu0 0.0
        %2053 = vmatprep.subr.mxu0 0.0
        %2054 = vmatpush1.msra.mxu0 0.0
        %2055 = vmatprep.subr.mxu0 0.0
        %2056 = vmatpush1.msra.mxu0 0.0
        %2057 = vmatprep.subr.mxu0 0.0
        %2058 = vmatpush1.msra.mxu0 0.0
        %2059 = vmatprep.subr.mxu0 0.0
        %2060 = vmatpush1.msra.mxu0 0.0
        %2061 = vmatprep.subr.mxu0 0.0
        %2062 = vmatpush1.msra.mxu0 0.0
        %2063 = vmatprep.subr.mxu0 0.0
        %2064 = vmatpush1.msra.mxu0 0.0
        %2065 = vmatprep.subr.mxu0 0.0
        %2066 = vmatpush1.msra.mxu0 0.0
        %2067 = vmatprep.subr.mxu0 0.0
        %2068 = vmatpush1.msra.mxu0 0.0
        %2069 = vmatprep.subr.mxu0 0.0
        %2070 = vmatpush1.msra.mxu0 0.0
        %2071 = vmatprep.subr.mxu0 0.0
        %2072 = vmatpush1.msra.mxu0 0.0
        %2073 = vmatprep.subr.mxu0 0.0
        %2074 = vmatpush1.msra.mxu0 0.0
        %2075 = vmatprep.subr.mxu0 0.0
        %2076 = vmatpush1.msra.mxu0 0.0
        %2077 = vmatprep.subr.mxu0 0.0
        %2078 = vmatpush1.msra.mxu0 0.0
        %2079 = vmatprep.subr.mxu0 0.0
        %2080 = vmatpush1.msra.mxu0 0.0
        %2081 = vmatprep.subr.mxu0 0.0
        %2082 = vmatpush1.msra.mxu0 0.0
        %2083 = vmatprep.subr.mxu0 0.0
        %2084 = vmatpush1.msra.mxu0 0.0
        %2085 = vmatprep.subr.mxu0 0.0
        %2086 = vmatpush1.msra.mxu0 0.0
        %2087 = vmatprep.subr.mxu0 0.0
        %2088 = vmatpush1.msra.mxu0 0.0
        %2089 = vmatprep.mubr.f32.mxu0 0.0
        %2090 = vmatmul.mubr.f32.gmra.mrb[0].mxu0 %v2023
        %v2091 = vpop.f32.mrb[0].mxu0
        %v2092 = vadd.f32 0.0, %v2091
        %v2093 = vpop.f32.mrb[0].mxu0
        %v2094 = vadd.f32 0.0, %v2093
        %2095 = vdwg.mxu0
        %v2096 = vadd.f32 %v2006, %v2092
        %v2097 = vadd.f32 %v2007, %v2094
        %v2098 = vld [vmem:[%s4] sm:$0xf]
        %2100 = vset.pattern.permute.xlu0 0
        %2101 = vperm.xlu0 %2100, %v2098
        %v2102 = vpop.permute.xlu0 %2101
        %v2104 = vadd.f32 %v2096, %v2102
        %v2105 = vadd.f32 %v2097, %v2102
        %v2106 = vsel %vm321, %v2104, 0.0
        %v2107 = vsel %vm321, %v2105, 0.0
        %v2108 = vadd.f32 %v2106, %v2107
        %2109 = vadd.xlane.f32.xlu0 %v2108
        %v2110 = vpop.xlane.xlu0 %2109
        %v2111 = vmul.f32 %v2104, %v2104
        %v2112 = vmul.f32 %v2105, %v2105
        %v2113 = vsel %vm321, %v2111, 0.0
        %v2114 = vsel %vm321, %v2112, 0.0
        %v2115 = vadd.f32 %v2113, %v2114
        %2116 = vadd.xlane.f32.xlu0 %v2115
        %v2117 = vpop.xlane.xlu0 %2116
        %v2118 = vmul.f32 %v2110, 0.00390625
        %v2119 = vmul.f32 %v2117, 0.00390625
        %v2120 = vmul.f32 %v2118, %v2118
        %v2121 = vsub.f32 %v2119, %v2120
        %v2122 = vmax.f32 %v2121, 0.0
        %v2123 = vsub.f32 %v2104, %v2118
        %v2124 = vsub.f32 %v2105, %v2118
        %v2125 = vadd.f32 %v2122, 1e-05
        %v2126 = vrsqrt.pop %v2125
        %v2127 = vmul.f32 %v2123, %v2126
        %v2128 = vmul.f32 %v2124, %v2126
        %vm2129 = vcmp.ge.f32.partialorder %v2127, 0.0
        %vm2130 = vcmp.ge.f32.partialorder %v2128, 0.0
        %v2131 = vmul.f32 %v2127, 0.01
        %v2132 = vmul.f32 %v2128, 0.01
        %v2133 = vsel %vm2129, %v2127, %v2131
        %v2134 = vsel %vm2130, %v2128, %v2132
        %v2137 = vcombine.low %v2133, %v2134
        %2139 = vst [vmem:[%s244] sm:$0xff] %v2137
        %s2140 = sand.u32 %s159, 1
        %s2141 = scalar_lea.sflag [#allocation3], %s2140
        %s2142 = sand.u32 %s159, 1
        %s2143 = smul.addr %s2142, 8
        %s2144 = scalar_lea.vmem [#allocation2], %s2143
        // Predicated region
        $region45: #{tpu_custom_call.1} parent=43 // pred_check
          %p2145 = pneg %p169
        $region46: #{tpu_custom_call.1} parent=43 // pred_check_branch
          %2147 = sbr.rel (%p2145) target = $region48
        $region47: #{tpu_custom_call.1} parent=43 // pred_region
          %s2149 = ssub.s32 128, 128
          %2150 = vsyncadd %s2141, %s2149
          %s2151 = smul.addr %s20, 2
          %s2152 = smul.addr %s2151, 64
          %s2153 = scalar_lea.hbm %s6, %s2152
          %s2155 = sshll.u32 %s2144, 4
          %s2156 = int_to_ptr.vmem [resolvable:$true] %s2155
          %2158 = dma.vmem_to_hbm [thread:$0]  %s2156, 128, %s2153, %s2141
        $region48: #{tpu_custom_call.1} parent=43 // pred_fallthru
          _
      $region44: #{tpu_custom_call.1} parent=5 // pred_fallthru
        _
      %p2159 = scmp.le.s32.totalorder 2, %s15
      // Predicated region
      $region49: #{tpu_custom_call.1} parent=5 // pred_check
        %p2160 = pneg %p2159
      $region50: #{tpu_custom_call.1} parent=5 // pred_check_branch
        %2162 = sbr.rel (%p2160) target = $region52
      $region51: #{tpu_custom_call.1} parent=5 // pred_region
        %s2163 = ssub.s32 %s15, 2
        // Predicated region
        $region53: #{tpu_custom_call.1} parent=51 // pred_check
          %p2164 = pneg %p175
        $region54: #{tpu_custom_call.1} parent=51 // pred_check_branch
          %2166 = sbr.rel (%p2164) target = $region56
        $region55: #{tpu_custom_call.1} parent=51 // pred_region
          %s2167 = sand.u32 %s160, 1
          %s2168 = scalar_lea.sflag [#allocation3], %s2167
          %s2169 = sand.u32 %s160, 1
          %s2170 = smul.addr %s2169, 8
          %s2171 = scalar_lea.vmem [#allocation2], %s2170
          %2172 = dma.done %s2168, 128
        $region56: #{tpu_custom_call.1} parent=51 // pred_fallthru
          _
      $region52: #{tpu_custom_call.1} parent=5 // pred_fallthru
        _
    $region6: #{tpu_custom_call.1} parent=1 // loop_footer
      %s19 = sadd.s32 1, %s15
    $region7: #{tpu_custom_call.1} parent=1 // loop_footer_branch
      %14 = sbr.rel target = $region3
    $region8: #{tpu_custom_call.1} parent=1 // loop_exit
      _
    %2173 = vsyncpa [#allocation3], 1
    %s2174 = scalar_lea.sflag [#allocation3], 1
    %2175 = vsyncpa %s2174, 1

</llo_original>
